<compile_context>
chip_gen: v7x
topology: tpu7x:2x2x1
jax: 0.10.0
libtpu: 0.0.40
codegen_flags: <defaults>
</compile_context>

<pallas_src>
import functools

import jax
import jax.numpy as jnp
from jax.experimental import pallas as pl
from jax.experimental.pallas import tpu as pltpu


# ----------------------------------------------------------------------------
# In-kernel helper: one GATv2Conv layer on fully VMEM-resident values.
# ----------------------------------------------------------------------------
def _gatv2_heads(x, mask, wl, wr, bl, br, att, heads, f_out):
    """Returns a list of `heads` per-head outputs [N, F] (pre-bias).

    x:         [N, Cin]   node features (all nodes resident)
    mask:      [N, N]     bool adjacency mask, mask[target, source]
    wl / wr:   [Cin, H*F] fused per-head weights (head-major columns)
    bl/br/att: [1, H*F]
    """
    n = x.shape[0]
    # Heads fused: one MXU pass over all H*F columns, computed ONCE per layer.
    xl = jnp.dot(x, wl, preferred_element_type=jnp.float32) + bl      # [N, H*F]
    xr = jnp.dot(x, wr, preferred_element_type=jnp.float32) + br      # [N, H*F]
    xl_t = xl.T                                                       # [H*F, N] (once per layer)
    neg = jnp.float32(-1e30)

    outs = []
    for h in range(heads):
        # Pairwise GATv2 scores on dense [N, N] tiles (sources on the lane axis);
        # the small F-contraction is an unrolled VPU loop, no [N, N, F] tensor.
        s = jnp.zeros((n, n), jnp.float32)
        for f in range(f_out):
            c = h * f_out + f
            z = xr[:, c:c + 1] + xl_t[c:c + 1, :]          # [Ntgt, Nsrc]
            z = jnp.maximum(z, 0.2 * z)                    # LeakyReLU(0.2)
            s = s + att[0:1, c:c + 1] * z

        # Masked softmax over sources (self loops guarantee >=1 unmasked entry).
        s = jnp.where(mask, s, neg)
        s = s - jnp.max(s, axis=1, keepdims=True)
        e = jnp.where(mask, jnp.exp(s), 0.0)
        alpha = e / jnp.sum(e, axis=1, keepdims=True)      # [N, N]

        outs.append(jnp.dot(alpha, xl[:, h * f_out:(h + 1) * f_out],
                            preferred_element_type=jnp.float32))      # [N, F]
    return outs


# ----------------------------------------------------------------------------
# Fused kernel: conv1 -> (+bias, ELU) -> conv2 -> (+bias), one invocation.
# ----------------------------------------------------------------------------
def _gnn_kernel(x_ref, adj_ref,
                wl1_ref, wr1_ref, bl1_ref, br1_ref, att1_ref, b1_ref,
                wl2_ref, wr2_ref, bl2_ref, br2_ref, att2_ref, b2_ref,
                out_ref, h_scratch, *, heads1, f1, f2):
    x = x_ref[...]                                         # [N, Cin]
    mask = adj_ref[...] > 0.0                              # [N, N]

    # ---- Layer 1 (concat=True) with bias + ELU fused into the epilogue ----
    outs1 = _gatv2_heads(x, mask, wl1_ref[...], wr1_ref[...], bl1_ref[...],
                         br1_ref[...], att1_ref[...], heads1, f1)
    for h, o_h in enumerate(outs1):
        o_h = o_h + b1_ref[0:1, h * f1:(h + 1) * f1]
        o_h = jnp.where(o_h > 0, o_h, jnp.exp(o_h) - 1.0)  # ELU
        h_scratch[:, h * f1:(h + 1) * f1] = o_h            # concat via column stores

    # dropout: identity (inference)

    # ---- Layer 2 (heads=1, concat=False: mean over one head == identity) ----
    h1 = h_scratch[...]                                    # [N, H*F1], stays in VMEM
    outs2 = _gatv2_heads(h1, mask, wl2_ref[...], wr2_ref[...], bl2_ref[...],
                         br2_ref[...], att2_ref[...], 1, f2)
    out_ref[...] = (outs2[0] + b2_ref[...]).astype(out_ref.dtype)


# ----------------------------------------------------------------------------
# Wrapper
# ----------------------------------------------------------------------------
def gatv2_node_gnn(x, adj, params):
    """Forward pass of GATv2NodeGNN (dropout = identity at inference)."""
    p1, p2 = params["conv1"], params["conv2"]
    N, Cin = x.shape
    H, _, F1 = p1["wl"].shape
    HF1 = H * F1
    _, _, F2 = p2["wl"].shape

    def pack_w(w):                       # [H, Cin, F] -> [Cin, H*F] (head-major cols)
        h, cin, f = w.shape
        return jnp.transpose(w, (1, 0, 2)).reshape(cin, h * f)

    def pack_v(v):                       # [H, 1, F] -> [1, H*F]
        return v.reshape(1, -1)

    wl1, wr1 = pack_w(p1["wl"]), pack_w(p1["wr"])
    bl1, br1, att1 = pack_v(p1["bl"]), pack_v(p1["br"]), pack_v(p1["att"])
    b1 = p1["bias"].reshape(1, HF1)
    wl2, wr2 = pack_w(p2["wl"]), pack_w(p2["wr"])
    bl2, br2, att2 = pack_v(p2["bl"]), pack_v(p2["br"]), pack_v(p2["att"])
    b2 = p2["bias"].reshape(1, F2)

    kernel = functools.partial(_gnn_kernel, heads1=H, f1=F1, f2=F2)

    def full(shape):                     # full-array block, single grid step
        return pl.BlockSpec(shape, lambda i: (0,) * len(shape))

    in_specs = [
        full((N, Cin)),                  # x
        full((N, N)),                    # adj
        full((Cin, HF1)), full((Cin, HF1)),                # Wl1, Wr1 (heads fused)
        full((1, HF1)), full((1, HF1)), full((1, HF1)),    # bl1, br1, att1
        full((1, HF1)),                                    # bias1
        full((HF1, F2)), full((HF1, F2)),                  # Wl2, Wr2
        full((1, F2)), full((1, F2)), full((1, F2)),       # bl2, br2, att2
        full((1, F2)),                                     # bias2
    ]

    return pl.pallas_call(
        kernel,
        out_shape=jax.ShapeDtypeStruct((N, F2), jnp.float32),
        grid=(1,),                        # single dispatch, everything resident
        in_specs=in_specs,
        out_specs=full((N, F2)),
        scratch_shapes=[pltpu.VMEM((N, HF1), jnp.float32)],   # layer-1 activation
        compiler_params=pltpu.CompilerParams(
            dimension_semantics=("arbitrary",)),
    )(x, adj, wl1, wr1, bl1, br1, att1, b1, wl2, wr2, bl2, br2, att2, b2)


# ----------------------------------------------------------------------------
# Pure-JAX reference (for correctness check)
# ----------------------------------------------------------------------------
def _ref_layer(x, wl, wr, bl, br, att, bias, adj, concat):
    xl = jnp.einsum("nc,hcf->hnf", x, wl) + bl          # [H, N, F]
    xr = jnp.einsum("nc,hcf->hnf", x, wr) + br
    z = xl[:, None, :, :] + xr[:, :, None, :]           # [H, Ntgt, Nsrc, F]
    z = jnp.where(z > 0, z, 0.2 * z)
    s = jnp.sum(z * att[:, None, :, :], axis=-1)        # [H, N, N]
    s = jnp.where(adj[None] > 0, s, -1e30)
    s = s - jnp.max(s, axis=-1, keepdims=True)
    e = jnp.where(adj[None] > 0, jnp.exp(s), 0.0)
    alpha = e / jnp.sum(e, axis=-1, keepdims=True)
    out = jnp.einsum("hij,hjf->hif", alpha, xl)
    if concat:
        y = jnp.transpose(out, (1, 0, 2)).reshape(x.shape[0], -1)
    else:
        y = jnp.mean(out, axis=0)
    return y + bias[None, :]


def _ref_gnn(x, adj, params):
    p1, p2 = params["conv1"], params["conv2"]
    h = _ref_layer(x, p1["wl"], p1["wr"], p1["bl"], p1["br"], p1["att"],
                   p1["bias"], adj, True)
    h = jnp.where(h > 0, h, jnp.exp(h) - 1.0)
    return _ref_layer(h, p2["wl"], p2["wr"], p2["bl"], p2["br"], p2["att"],
                      p2["bias"], adj, False)


# ----------------------------------------------------------------------------
# Main
# ----------------------------------------------------------------------------
if __name__ == "__main__":
    N, C_IN, HIDDEN, OUT_C, HEADS, E = 16, 8, 8, 4, 4, 40

    key = jax.random.PRNGKey(0)
    ks = jax.random.split(key, 16)

    x = jax.random.normal(ks[0], (N, C_IN), jnp.float32)
    edge_index = jax.random.randint(ks[1], (2, E), 0, N, dtype=jnp.int32)

    # dense adjacency with self loops: adj[target, source] = 1
    adj = jnp.zeros((N, N), jnp.float32)
    adj = adj.at[edge_index[1], edge_index[0]].set(1.0)
    adj = adj.at[jnp.arange(N), jnp.arange(N)].set(1.0)

    def glorot(k, shape, fan_in, fan_out):
        lim = (6.0 / (fan_in + fan_out)) ** 0.5
        return jax.random.uniform(k, shape, jnp.float32, -lim, lim)

    params = {
        "conv1": {
            "wl":  glorot(ks[2], (HEADS, C_IN, HIDDEN), C_IN, HEADS * HIDDEN),
            "wr":  glorot(ks[3], (HEADS, C_IN, HIDDEN), C_IN, HEADS * HIDDEN),
            "bl":  0.1 * jax.random.normal(ks[4], (HEADS, 1, HIDDEN), jnp.float32),
            "br":  0.1 * jax.random.normal(ks[5], (HEADS, 1, HIDDEN), jnp.float32),
            "att": glorot(ks[6], (HEADS, 1, HIDDEN), HIDDEN, HIDDEN),
            "bias": 0.1 * jax.random.normal(ks[7], (HEADS * HIDDEN,), jnp.float32),
        },
        "conv2": {
            "wl":  glorot(ks[8], (1, HEADS * HIDDEN, OUT_C), HEADS * HIDDEN, OUT_C),
            "wr":  glorot(ks[9], (1, HEADS * HIDDEN, OUT_C), HEADS * HIDDEN, OUT_C),
            "bl":  0.1 * jax.random.normal(ks[10], (1, 1, OUT_C), jnp.float32),
            "br":  0.1 * jax.random.normal(ks[11], (1, 1, OUT_C), jnp.float32),
            "att": glorot(ks[12], (1, 1, OUT_C), OUT_C, OUT_C),
            "bias": 0.1 * jax.random.normal(ks[13], (OUT_C,), jnp.float32),
        },
    }

    y = jax.jit(gatv2_node_gnn)(x, adj, params)
    y = jax.block_until_ready(y)

    y_ref = _ref_gnn(x, adj, params)
    assert y.shape == (N, OUT_C)
    assert jnp.allclose(y, y_ref, atol=1e-4, rtol=1e-4), "mismatch vs reference"

    print("KERNEL_OK")
</pallas_src>

<mosaic_0001>
module attributes {stable_mosaic.version = 11 : i64} {
  func.func @_gnn_kernel(%arg0: i32, %arg1: memref<16x8xf32, #tpu.memory_space<vmem>>, %arg2: memref<16x16xf32, #tpu.memory_space<vmem>>, %arg3: memref<8x32xf32, #tpu.memory_space<vmem>>, %arg4: memref<8x32xf32, #tpu.memory_space<vmem>>, %arg5: memref<1x32xf32, #tpu.memory_space<vmem>>, %arg6: memref<1x32xf32, #tpu.memory_space<vmem>>, %arg7: memref<1x32xf32, #tpu.memory_space<vmem>>, %arg8: memref<1x32xf32, #tpu.memory_space<vmem>>, %arg9: memref<32x4xf32, #tpu.memory_space<vmem>>, %arg10: memref<32x4xf32, #tpu.memory_space<vmem>>, %arg11: memref<1x4xf32, #tpu.memory_space<vmem>>, %arg12: memref<1x4xf32, #tpu.memory_space<vmem>>, %arg13: memref<1x4xf32, #tpu.memory_space<vmem>>, %arg14: memref<1x4xf32, #tpu.memory_space<vmem>>, %arg15: memref<16x4xf32, #tpu.memory_space<vmem>>, %arg16: memref<16x32xf32, #tpu.memory_space<vmem>>) attributes {dimension_semantics = [#tpu.dimension_semantics<arbitrary>], iteration_bounds = array<i64: 1>, scalar_prefetch = 0 : i64, scratch_operands = 1 : i64, tpu.core_type = #tpu.core_type<tc>, window_params = [{pipeline_mode = #tpu.pipeline_mode<synchronous>, transform_indices = @transform_0, window_bounds = array<i64: 16, 8>}, {pipeline_mode = #tpu.pipeline_mode<synchronous>, transform_indices = @transform_1, window_bounds = array<i64: 16, 16>}, {pipeline_mode = #tpu.pipeline_mode<synchronous>, transform_indices = @transform_2, window_bounds = array<i64: 8, 32>}, {pipeline_mode = #tpu.pipeline_mode<synchronous>, transform_indices = @transform_3, window_bounds = array<i64: 8, 32>}, {pipeline_mode = #tpu.pipeline_mode<synchronous>, transform_indices = @transform_4, window_bounds = array<i64: 1, 32>}, {pipeline_mode = #tpu.pipeline_mode<synchronous>, transform_indices = @transform_5, window_bounds = array<i64: 1, 32>}, {pipeline_mode = #tpu.pipeline_mode<synchronous>, transform_indices = @transform_6, window_bounds = array<i64: 1, 32>}, {pipeline_mode = #tpu.pipeline_mode<synchronous>, transform_indices = @transform_7, window_bounds = array<i64: 1, 32>}, {pipeline_mode = #tpu.pipeline_mode<synchronous>, transform_indices = @transform_8, window_bounds = array<i64: 32, 4>}, {pipeline_mode = #tpu.pipeline_mode<synchronous>, transform_indices = @transform_9, window_bounds = array<i64: 32, 4>}, {pipeline_mode = #tpu.pipeline_mode<synchronous>, transform_indices = @transform_10, window_bounds = array<i64: 1, 4>}, {pipeline_mode = #tpu.pipeline_mode<synchronous>, transform_indices = @transform_11, window_bounds = array<i64: 1, 4>}, {pipeline_mode = #tpu.pipeline_mode<synchronous>, transform_indices = @transform_12, window_bounds = array<i64: 1, 4>}, {pipeline_mode = #tpu.pipeline_mode<synchronous>, transform_indices = @transform_13, window_bounds = array<i64: 1, 4>}, {pipeline_mode = #tpu.pipeline_mode<synchronous>, transform_indices = @transform_14, window_bounds = array<i64: 16, 4>}]} {
    %c0 = arith.constant 0 : index
    %c0_0 = arith.constant 0 : index
    %0 = vector.load %arg1[%c0, %c0_0] : memref<16x8xf32, #tpu.memory_space<vmem>>, vector<16x8xf32>
    %c0_1 = arith.constant 0 : index
    %c0_2 = arith.constant 0 : index
    %1 = vector.load %arg2[%c0_1, %c0_2] : memref<16x16xf32, #tpu.memory_space<vmem>>, vector<16x16xf32>
    %cst = arith.constant 0.000000e+00 : f32
    %2 = vector.broadcast %cst : f32 to vector<16x16xf32>
    %3 = arith.cmpf ogt, %1, %2 : vector<16x16xf32>
    %c0_3 = arith.constant 0 : index
    %c0_4 = arith.constant 0 : index
    %4 = vector.load %arg3[%c0_3, %c0_4] : memref<8x32xf32, #tpu.memory_space<vmem>>, vector<8x32xf32>
    %c0_5 = arith.constant 0 : index
    %c0_6 = arith.constant 0 : index
    %5 = vector.load %arg4[%c0_5, %c0_6] : memref<8x32xf32, #tpu.memory_space<vmem>>, vector<8x32xf32>
    %c0_7 = arith.constant 0 : index
    %c0_8 = arith.constant 0 : index
    %6 = vector.load %arg5[%c0_7, %c0_8] : memref<1x32xf32, #tpu.memory_space<vmem>>, vector<1x32xf32>
    %c0_9 = arith.constant 0 : index
    %c0_10 = arith.constant 0 : index
    %7 = vector.load %arg6[%c0_9, %c0_10] : memref<1x32xf32, #tpu.memory_space<vmem>>, vector<1x32xf32>
    %c0_11 = arith.constant 0 : index
    %c0_12 = arith.constant 0 : index
    %8 = vector.load %arg7[%c0_11, %c0_12] : memref<1x32xf32, #tpu.memory_space<vmem>>, vector<1x32xf32>
    %cst_13 = arith.constant dense<0.000000e+00> : vector<16x32xf32>
    %9 = tpu.matmul %0, %4, %cst_13 {dimension_numbers = #tpu.dot_dimension_numbers<[1], [0], [0], [1], [0, 0, 1, 1], [], []>} : vector<16x8xf32>, vector<8x32xf32>, vector<16x32xf32> -> vector<16x32xf32>
    %10 = vector.broadcast %6 : vector<1x32xf32> to vector<16x32xf32>
    %11 = arith.addf %9, %10 : vector<16x32xf32>
    %cst_14 = arith.constant dense<0.000000e+00> : vector<16x32xf32>
    %12 = tpu.matmul %0, %5, %cst_14 {dimension_numbers = #tpu.dot_dimension_numbers<[1], [0], [0], [1], [0, 0, 1, 1], [], []>} : vector<16x8xf32>, vector<8x32xf32>, vector<16x32xf32> -> vector<16x32xf32>
    %13 = vector.broadcast %7 : vector<1x32xf32> to vector<16x32xf32>
    %14 = arith.addf %12, %13 : vector<16x32xf32>
    %15 = tpu.transpose %11, [1, 0] : vector<16x32xf32> -> vector<32x16xf32>
    %cst_15 = arith.constant 0.000000e+00 : f32
    %16 = vector.broadcast %cst_15 : f32 to vector<16x16xf32>
    %17 = vector.extract_strided_slice %14 {offsets = [0, 0], sizes = [16, 1], strides = [1, 1]} : vector<16x32xf32> to vector<16x1xf32>
    %18 = vector.extract_strided_slice %15 {offsets = [0, 0], sizes = [1, 16], strides = [1, 1]} : vector<32x16xf32> to vector<1x16xf32>
    %19 = vector.broadcast %17 : vector<16x1xf32> to vector<16x16xf32>
    %20 = vector.broadcast %18 : vector<1x16xf32> to vector<16x16xf32>
    %21 = arith.addf %19, %20 : vector<16x16xf32>
    %cst_16 = arith.constant 2.000000e-01 : f32
    %22 = vector.broadcast %cst_16 : f32 to vector<16x16xf32>
    %23 = arith.mulf %22, %21 : vector<16x16xf32>
    %24 = arith.maximumf %21, %23 : vector<16x16xf32>
    %25 = vector.extract_strided_slice %8 {offsets = [0, 0], sizes = [1, 1], strides = [1, 1]} : vector<1x32xf32> to vector<1x1xf32>
    %26 = vector.broadcast %25 : vector<1x1xf32> to vector<16x16xf32>
    %27 = arith.mulf %26, %24 : vector<16x16xf32>
    %28 = arith.addf %16, %27 : vector<16x16xf32>
    %29 = vector.extract_strided_slice %14 {offsets = [0, 1], sizes = [16, 1], strides = [1, 1]} : vector<16x32xf32> to vector<16x1xf32>
    %30 = vector.extract_strided_slice %15 {offsets = [1, 0], sizes = [1, 16], strides = [1, 1]} : vector<32x16xf32> to vector<1x16xf32>
    %31 = vector.broadcast %29 : vector<16x1xf32> to vector<16x16xf32>
    %32 = vector.broadcast %30 : vector<1x16xf32> to vector<16x16xf32>
    %33 = arith.addf %31, %32 : vector<16x16xf32>
    %cst_17 = arith.constant 2.000000e-01 : f32
    %34 = vector.broadcast %cst_17 : f32 to vector<16x16xf32>
    %35 = arith.mulf %34, %33 : vector<16x16xf32>
    %36 = arith.maximumf %33, %35 : vector<16x16xf32>
    %37 = vector.extract_strided_slice %8 {offsets = [0, 1], sizes = [1, 1], strides = [1, 1]} : vector<1x32xf32> to vector<1x1xf32>
    %38 = vector.broadcast %37 : vector<1x1xf32> to vector<16x16xf32>
    %39 = arith.mulf %38, %36 : vector<16x16xf32>
    %40 = arith.addf %28, %39 : vector<16x16xf32>
    %41 = vector.extract_strided_slice %14 {offsets = [0, 2], sizes = [16, 1], strides = [1, 1]} : vector<16x32xf32> to vector<16x1xf32>
    %42 = vector.extract_strided_slice %15 {offsets = [2, 0], sizes = [1, 16], strides = [1, 1]} : vector<32x16xf32> to vector<1x16xf32>
    %43 = vector.broadcast %41 : vector<16x1xf32> to vector<16x16xf32>
    %44 = vector.broadcast %42 : vector<1x16xf32> to vector<16x16xf32>
    %45 = arith.addf %43, %44 : vector<16x16xf32>
    %cst_18 = arith.constant 2.000000e-01 : f32
    %46 = vector.broadcast %cst_18 : f32 to vector<16x16xf32>
    %47 = arith.mulf %46, %45 : vector<16x16xf32>
    %48 = arith.maximumf %45, %47 : vector<16x16xf32>
    %49 = vector.extract_strided_slice %8 {offsets = [0, 2], sizes = [1, 1], strides = [1, 1]} : vector<1x32xf32> to vector<1x1xf32>
    %50 = vector.broadcast %49 : vector<1x1xf32> to vector<16x16xf32>
    %51 = arith.mulf %50, %48 : vector<16x16xf32>
    %52 = arith.addf %40, %51 : vector<16x16xf32>
    %53 = vector.extract_strided_slice %14 {offsets = [0, 3], sizes = [16, 1], strides = [1, 1]} : vector<16x32xf32> to vector<16x1xf32>
    %54 = vector.extract_strided_slice %15 {offsets = [3, 0], sizes = [1, 16], strides = [1, 1]} : vector<32x16xf32> to vector<1x16xf32>
    %55 = vector.broadcast %53 : vector<16x1xf32> to vector<16x16xf32>
    %56 = vector.broadcast %54 : vector<1x16xf32> to vector<16x16xf32>
    %57 = arith.addf %55, %56 : vector<16x16xf32>
    %cst_19 = arith.constant 2.000000e-01 : f32
    %58 = vector.broadcast %cst_19 : f32 to vector<16x16xf32>
    %59 = arith.mulf %58, %57 : vector<16x16xf32>
    %60 = arith.maximumf %57, %59 : vector<16x16xf32>
    %61 = vector.extract_strided_slice %8 {offsets = [0, 3], sizes = [1, 1], strides = [1, 1]} : vector<1x32xf32> to vector<1x1xf32>
    %62 = vector.broadcast %61 : vector<1x1xf32> to vector<16x16xf32>
    %63 = arith.mulf %62, %60 : vector<16x16xf32>
    %64 = arith.addf %52, %63 : vector<16x16xf32>
    %65 = vector.extract_strided_slice %14 {offsets = [0, 4], sizes = [16, 1], strides = [1, 1]} : vector<16x32xf32> to vector<16x1xf32>
    %66 = vector.extract_strided_slice %15 {offsets = [4, 0], sizes = [1, 16], strides = [1, 1]} : vector<32x16xf32> to vector<1x16xf32>
    %67 = vector.broadcast %65 : vector<16x1xf32> to vector<16x16xf32>
    %68 = vector.broadcast %66 : vector<1x16xf32> to vector<16x16xf32>
    %69 = arith.addf %67, %68 : vector<16x16xf32>
    %cst_20 = arith.constant 2.000000e-01 : f32
    %70 = vector.broadcast %cst_20 : f32 to vector<16x16xf32>
    %71 = arith.mulf %70, %69 : vector<16x16xf32>
    %72 = arith.maximumf %69, %71 : vector<16x16xf32>
    %73 = vector.extract_strided_slice %8 {offsets = [0, 4], sizes = [1, 1], strides = [1, 1]} : vector<1x32xf32> to vector<1x1xf32>
    %74 = vector.broadcast %73 : vector<1x1xf32> to vector<16x16xf32>
    %75 = arith.mulf %74, %72 : vector<16x16xf32>
    %76 = arith.addf %64, %75 : vector<16x16xf32>
    %77 = vector.extract_strided_slice %14 {offsets = [0, 5], sizes = [16, 1], strides = [1, 1]} : vector<16x32xf32> to vector<16x1xf32>
    %78 = vector.extract_strided_slice %15 {offsets = [5, 0], sizes = [1, 16], strides = [1, 1]} : vector<32x16xf32> to vector<1x16xf32>
    %79 = vector.broadcast %77 : vector<16x1xf32> to vector<16x16xf32>
    %80 = vector.broadcast %78 : vector<1x16xf32> to vector<16x16xf32>
    %81 = arith.addf %79, %80 : vector<16x16xf32>
    %cst_21 = arith.constant 2.000000e-01 : f32
    %82 = vector.broadcast %cst_21 : f32 to vector<16x16xf32>
    %83 = arith.mulf %82, %81 : vector<16x16xf32>
    %84 = arith.maximumf %81, %83 : vector<16x16xf32>
    %85 = vector.extract_strided_slice %8 {offsets = [0, 5], sizes = [1, 1], strides = [1, 1]} : vector<1x32xf32> to vector<1x1xf32>
    %86 = vector.broadcast %85 : vector<1x1xf32> to vector<16x16xf32>
    %87 = arith.mulf %86, %84 : vector<16x16xf32>
    %88 = arith.addf %76, %87 : vector<16x16xf32>
    %89 = vector.extract_strided_slice %14 {offsets = [0, 6], sizes = [16, 1], strides = [1, 1]} : vector<16x32xf32> to vector<16x1xf32>
    %90 = vector.extract_strided_slice %15 {offsets = [6, 0], sizes = [1, 16], strides = [1, 1]} : vector<32x16xf32> to vector<1x16xf32>
    %91 = vector.broadcast %89 : vector<16x1xf32> to vector<16x16xf32>
    %92 = vector.broadcast %90 : vector<1x16xf32> to vector<16x16xf32>
    %93 = arith.addf %91, %92 : vector<16x16xf32>
    %cst_22 = arith.constant 2.000000e-01 : f32
    %94 = vector.broadcast %cst_22 : f32 to vector<16x16xf32>
    %95 = arith.mulf %94, %93 : vector<16x16xf32>
    %96 = arith.maximumf %93, %95 : vector<16x16xf32>
    %97 = vector.extract_strided_slice %8 {offsets = [0, 6], sizes = [1, 1], strides = [1, 1]} : vector<1x32xf32> to vector<1x1xf32>
    %98 = vector.broadcast %97 : vector<1x1xf32> to vector<16x16xf32>
    %99 = arith.mulf %98, %96 : vector<16x16xf32>
    %100 = arith.addf %88, %99 : vector<16x16xf32>
    %101 = vector.extract_strided_slice %14 {offsets = [0, 7], sizes = [16, 1], strides = [1, 1]} : vector<16x32xf32> to vector<16x1xf32>
    %102 = vector.extract_strided_slice %15 {offsets = [7, 0], sizes = [1, 16], strides = [1, 1]} : vector<32x16xf32> to vector<1x16xf32>
    %103 = vector.broadcast %101 : vector<16x1xf32> to vector<16x16xf32>
    %104 = vector.broadcast %102 : vector<1x16xf32> to vector<16x16xf32>
    %105 = arith.addf %103, %104 : vector<16x16xf32>
    %cst_23 = arith.constant 2.000000e-01 : f32
    %106 = vector.broadcast %cst_23 : f32 to vector<16x16xf32>
    %107 = arith.mulf %106, %105 : vector<16x16xf32>
    %108 = arith.maximumf %105, %107 : vector<16x16xf32>
    %109 = vector.extract_strided_slice %8 {offsets = [0, 7], sizes = [1, 1], strides = [1, 1]} : vector<1x32xf32> to vector<1x1xf32>
    %110 = vector.broadcast %109 : vector<1x1xf32> to vector<16x16xf32>
    %111 = arith.mulf %110, %108 : vector<16x16xf32>
    %112 = arith.addf %100, %111 : vector<16x16xf32>
    %cst_24 = arith.constant -1.000000e+30 : f32
    %113 = vector.broadcast %cst_24 : f32 to vector<16x16xf32>
    %114 = arith.select %3, %112, %113 : vector<16x16xi1>, vector<16x16xf32>
    %cst_25 = arith.constant dense<0xFF800000> : vector<16xf32>
    %115 = vector.multi_reduction <maximumf>, %114, %cst_25 [1] : vector<16x16xf32> to vector<16xf32>
    %116 = vector.shape_cast %115 : vector<16xf32> to vector<16x1xf32>
    %117 = vector.broadcast %116 : vector<16x1xf32> to vector<16x16xf32>
    %118 = arith.subf %114, %117 : vector<16x16xf32>
    %119 = math.exp %118 : vector<16x16xf32>
    %cst_26 = arith.constant 0.000000e+00 : f32
    %120 = vector.broadcast %cst_26 : f32 to vector<16x16xf32>
    %121 = arith.select %3, %119, %120 : vector<16x16xi1>, vector<16x16xf32>
    %cst_27 = arith.constant dense<0.000000e+00> : vector<16xf32>
    %122 = vector.multi_reduction <add>, %121, %cst_27 [1] : vector<16x16xf32> to vector<16xf32>
    %123 = vector.shape_cast %122 : vector<16xf32> to vector<16x1xf32>
    %124 = vector.broadcast %123 : vector<16x1xf32> to vector<16x16xf32>
    %125 = arith.divf %121, %124 : vector<16x16xf32>
    %126 = vector.extract_strided_slice %11 {offsets = [0, 0], sizes = [16, 8], strides = [1, 1]} : vector<16x32xf32> to vector<16x8xf32>
    %cst_28 = arith.constant dense<0.000000e+00> : vector<16x8xf32>
    %127 = tpu.matmul %125, %126, %cst_28 {dimension_numbers = #tpu.dot_dimension_numbers<[1], [0], [0], [1], [0, 0, 1, 1], [], []>} : vector<16x16xf32>, vector<16x8xf32>, vector<16x8xf32> -> vector<16x8xf32>
    %cst_29 = arith.constant 0.000000e+00 : f32
    %128 = vector.broadcast %cst_29 : f32 to vector<16x16xf32>
    %129 = vector.extract_strided_slice %14 {offsets = [0, 8], sizes = [16, 1], strides = [1, 1]} : vector<16x32xf32> to vector<16x1xf32>
    %130 = vector.extract_strided_slice %15 {offsets = [8, 0], sizes = [1, 16], strides = [1, 1]} : vector<32x16xf32> to vector<1x16xf32>
    %131 = vector.broadcast %129 : vector<16x1xf32> to vector<16x16xf32>
    %132 = vector.broadcast %130 : vector<1x16xf32> to vector<16x16xf32>
    %133 = arith.addf %131, %132 : vector<16x16xf32>
    %cst_30 = arith.constant 2.000000e-01 : f32
    %134 = vector.broadcast %cst_30 : f32 to vector<16x16xf32>
    %135 = arith.mulf %134, %133 : vector<16x16xf32>
    %136 = arith.maximumf %133, %135 : vector<16x16xf32>
    %137 = vector.extract_strided_slice %8 {offsets = [0, 8], sizes = [1, 1], strides = [1, 1]} : vector<1x32xf32> to vector<1x1xf32>
    %138 = vector.broadcast %137 : vector<1x1xf32> to vector<16x16xf32>
    %139 = arith.mulf %138, %136 : vector<16x16xf32>
    %140 = arith.addf %128, %139 : vector<16x16xf32>
    %141 = vector.extract_strided_slice %14 {offsets = [0, 9], sizes = [16, 1], strides = [1, 1]} : vector<16x32xf32> to vector<16x1xf32>
    %142 = vector.extract_strided_slice %15 {offsets = [9, 0], sizes = [1, 16], strides = [1, 1]} : vector<32x16xf32> to vector<1x16xf32>
    %143 = vector.broadcast %141 : vector<16x1xf32> to vector<16x16xf32>
    %144 = vector.broadcast %142 : vector<1x16xf32> to vector<16x16xf32>
    %145 = arith.addf %143, %144 : vector<16x16xf32>
    %cst_31 = arith.constant 2.000000e-01 : f32
    %146 = vector.broadcast %cst_31 : f32 to vector<16x16xf32>
    %147 = arith.mulf %146, %145 : vector<16x16xf32>
    %148 = arith.maximumf %145, %147 : vector<16x16xf32>
    %149 = vector.extract_strided_slice %8 {offsets = [0, 9], sizes = [1, 1], strides = [1, 1]} : vector<1x32xf32> to vector<1x1xf32>
    %150 = vector.broadcast %149 : vector<1x1xf32> to vector<16x16xf32>
    %151 = arith.mulf %150, %148 : vector<16x16xf32>
    %152 = arith.addf %140, %151 : vector<16x16xf32>
    %153 = vector.extract_strided_slice %14 {offsets = [0, 10], sizes = [16, 1], strides = [1, 1]} : vector<16x32xf32> to vector<16x1xf32>
    %154 = vector.extract_strided_slice %15 {offsets = [10, 0], sizes = [1, 16], strides = [1, 1]} : vector<32x16xf32> to vector<1x16xf32>
    %155 = vector.broadcast %153 : vector<16x1xf32> to vector<16x16xf32>
    %156 = vector.broadcast %154 : vector<1x16xf32> to vector<16x16xf32>
    %157 = arith.addf %155, %156 : vector<16x16xf32>
    %cst_32 = arith.constant 2.000000e-01 : f32
    %158 = vector.broadcast %cst_32 : f32 to vector<16x16xf32>
    %159 = arith.mulf %158, %157 : vector<16x16xf32>
    %160 = arith.maximumf %157, %159 : vector<16x16xf32>
    %161 = vector.extract_strided_slice %8 {offsets = [0, 10], sizes = [1, 1], strides = [1, 1]} : vector<1x32xf32> to vector<1x1xf32>
    %162 = vector.broadcast %161 : vector<1x1xf32> to vector<16x16xf32>
    %163 = arith.mulf %162, %160 : vector<16x16xf32>
    %164 = arith.addf %152, %163 : vector<16x16xf32>
    %165 = vector.extract_strided_slice %14 {offsets = [0, 11], sizes = [16, 1], strides = [1, 1]} : vector<16x32xf32> to vector<16x1xf32>
    %166 = vector.extract_strided_slice %15 {offsets = [11, 0], sizes = [1, 16], strides = [1, 1]} : vector<32x16xf32> to vector<1x16xf32>
    %167 = vector.broadcast %165 : vector<16x1xf32> to vector<16x16xf32>
    %168 = vector.broadcast %166 : vector<1x16xf32> to vector<16x16xf32>
    %169 = arith.addf %167, %168 : vector<16x16xf32>
    %cst_33 = arith.constant 2.000000e-01 : f32
    %170 = vector.broadcast %cst_33 : f32 to vector<16x16xf32>
    %171 = arith.mulf %170, %169 : vector<16x16xf32>
    %172 = arith.maximumf %169, %171 : vector<16x16xf32>
    %173 = vector.extract_strided_slice %8 {offsets = [0, 11], sizes = [1, 1], strides = [1, 1]} : vector<1x32xf32> to vector<1x1xf32>
    %174 = vector.broadcast %173 : vector<1x1xf32> to vector<16x16xf32>
    %175 = arith.mulf %174, %172 : vector<16x16xf32>
    %176 = arith.addf %164, %175 : vector<16x16xf32>
    %177 = vector.extract_strided_slice %14 {offsets = [0, 12], sizes = [16, 1], strides = [1, 1]} : vector<16x32xf32> to vector<16x1xf32>
    %178 = vector.extract_strided_slice %15 {offsets = [12, 0], sizes = [1, 16], strides = [1, 1]} : vector<32x16xf32> to vector<1x16xf32>
    %179 = vector.broadcast %177 : vector<16x1xf32> to vector<16x16xf32>
    %180 = vector.broadcast %178 : vector<1x16xf32> to vector<16x16xf32>
    %181 = arith.addf %179, %180 : vector<16x16xf32>
    %cst_34 = arith.constant 2.000000e-01 : f32
    %182 = vector.broadcast %cst_34 : f32 to vector<16x16xf32>
    %183 = arith.mulf %182, %181 : vector<16x16xf32>
    %184 = arith.maximumf %181, %183 : vector<16x16xf32>
    %185 = vector.extract_strided_slice %8 {offsets = [0, 12], sizes = [1, 1], strides = [1, 1]} : vector<1x32xf32> to vector<1x1xf32>
    %186 = vector.broadcast %185 : vector<1x1xf32> to vector<16x16xf32>
    %187 = arith.mulf %186, %184 : vector<16x16xf32>
    %188 = arith.addf %176, %187 : vector<16x16xf32>
    %189 = vector.extract_strided_slice %14 {offsets = [0, 13], sizes = [16, 1], strides = [1, 1]} : vector<16x32xf32> to vector<16x1xf32>
    %190 = vector.extract_strided_slice %15 {offsets = [13, 0], sizes = [1, 16], strides = [1, 1]} : vector<32x16xf32> to vector<1x16xf32>
    %191 = vector.broadcast %189 : vector<16x1xf32> to vector<16x16xf32>
    %192 = vector.broadcast %190 : vector<1x16xf32> to vector<16x16xf32>
    %193 = arith.addf %191, %192 : vector<16x16xf32>
    %cst_35 = arith.constant 2.000000e-01 : f32
    %194 = vector.broadcast %cst_35 : f32 to vector<16x16xf32>
    %195 = arith.mulf %194, %193 : vector<16x16xf32>
    %196 = arith.maximumf %193, %195 : vector<16x16xf32>
    %197 = vector.extract_strided_slice %8 {offsets = [0, 13], sizes = [1, 1], strides = [1, 1]} : vector<1x32xf32> to vector<1x1xf32>
    %198 = vector.broadcast %197 : vector<1x1xf32> to vector<16x16xf32>
    %199 = arith.mulf %198, %196 : vector<16x16xf32>
    %200 = arith.addf %188, %199 : vector<16x16xf32>
    %201 = vector.extract_strided_slice %14 {offsets = [0, 14], sizes = [16, 1], strides = [1, 1]} : vector<16x32xf32> to vector<16x1xf32>
    %202 = vector.extract_strided_slice %15 {offsets = [14, 0], sizes = [1, 16], strides = [1, 1]} : vector<32x16xf32> to vector<1x16xf32>
    %203 = vector.broadcast %201 : vector<16x1xf32> to vector<16x16xf32>
    %204 = vector.broadcast %202 : vector<1x16xf32> to vector<16x16xf32>
    %205 = arith.addf %203, %204 : vector<16x16xf32>
    %cst_36 = arith.constant 2.000000e-01 : f32
    %206 = vector.broadcast %cst_36 : f32 to vector<16x16xf32>
    %207 = arith.mulf %206, %205 : vector<16x16xf32>
    %208 = arith.maximumf %205, %207 : vector<16x16xf32>
    %209 = vector.extract_strided_slice %8 {offsets = [0, 14], sizes = [1, 1], strides = [1, 1]} : vector<1x32xf32> to vector<1x1xf32>
    %210 = vector.broadcast %209 : vector<1x1xf32> to vector<16x16xf32>
    %211 = arith.mulf %210, %208 : vector<16x16xf32>
    %212 = arith.addf %200, %211 : vector<16x16xf32>
    %213 = vector.extract_strided_slice %14 {offsets = [0, 15], sizes = [16, 1], strides = [1, 1]} : vector<16x32xf32> to vector<16x1xf32>
    %214 = vector.extract_strided_slice %15 {offsets = [15, 0], sizes = [1, 16], strides = [1, 1]} : vector<32x16xf32> to vector<1x16xf32>
    %215 = vector.broadcast %213 : vector<16x1xf32> to vector<16x16xf32>
    %216 = vector.broadcast %214 : vector<1x16xf32> to vector<16x16xf32>
    %217 = arith.addf %215, %216 : vector<16x16xf32>
    %cst_37 = arith.constant 2.000000e-01 : f32
    %218 = vector.broadcast %cst_37 : f32 to vector<16x16xf32>
    %219 = arith.mulf %218, %217 : vector<16x16xf32>
    %220 = arith.maximumf %217, %219 : vector<16x16xf32>
    %221 = vector.extract_strided_slice %8 {offsets = [0, 15], sizes = [1, 1], strides = [1, 1]} : vector<1x32xf32> to vector<1x1xf32>
    %222 = vector.broadcast %221 : vector<1x1xf32> to vector<16x16xf32>
    %223 = arith.mulf %222, %220 : vector<16x16xf32>
    %224 = arith.addf %212, %223 : vector<16x16xf32>
    %cst_38 = arith.constant -1.000000e+30 : f32
    %225 = vector.broadcast %cst_38 : f32 to vector<16x16xf32>
    %226 = arith.select %3, %224, %225 : vector<16x16xi1>, vector<16x16xf32>
    %cst_39 = arith.constant dense<0xFF800000> : vector<16xf32>
    %227 = vector.multi_reduction <maximumf>, %226, %cst_39 [1] : vector<16x16xf32> to vector<16xf32>
    %228 = vector.shape_cast %227 : vector<16xf32> to vector<16x1xf32>
    %229 = vector.broadcast %228 : vector<16x1xf32> to vector<16x16xf32>
    %230 = arith.subf %226, %229 : vector<16x16xf32>
    %231 = math.exp %230 : vector<16x16xf32>
    %cst_40 = arith.constant 0.000000e+00 : f32
    %232 = vector.broadcast %cst_40 : f32 to vector<16x16xf32>
    %233 = arith.select %3, %231, %232 : vector<16x16xi1>, vector<16x16xf32>
    %cst_41 = arith.constant dense<0.000000e+00> : vector<16xf32>
    %234 = vector.multi_reduction <add>, %233, %cst_41 [1] : vector<16x16xf32> to vector<16xf32>
    %235 = vector.shape_cast %234 : vector<16xf32> to vector<16x1xf32>
    %236 = vector.broadcast %235 : vector<16x1xf32> to vector<16x16xf32>
    %237 = arith.divf %233, %236 : vector<16x16xf32>
    %238 = vector.extract_strided_slice %11 {offsets = [0, 8], sizes = [16, 8], strides = [1, 1]} : vector<16x32xf32> to vector<16x8xf32>
    %cst_42 = arith.constant dense<0.000000e+00> : vector<16x8xf32>
    %239 = tpu.matmul %237, %238, %cst_42 {dimension_numbers = #tpu.dot_dimension_numbers<[1], [0], [0], [1], [0, 0, 1, 1], [], []>} : vector<16x16xf32>, vector<16x8xf32>, vector<16x8xf32> -> vector<16x8xf32>
    %cst_43 = arith.constant 0.000000e+00 : f32
    %240 = vector.broadcast %cst_43 : f32 to vector<16x16xf32>
    %241 = vector.extract_strided_slice %14 {offsets = [0, 16], sizes = [16, 1], strides = [1, 1]} : vector<16x32xf32> to vector<16x1xf32>
    %242 = vector.extract_strided_slice %15 {offsets = [16, 0], sizes = [1, 16], strides = [1, 1]} : vector<32x16xf32> to vector<1x16xf32>
    %243 = vector.broadcast %241 : vector<16x1xf32> to vector<16x16xf32>
    %244 = vector.broadcast %242 : vector<1x16xf32> to vector<16x16xf32>
    %245 = arith.addf %243, %244 : vector<16x16xf32>
    %cst_44 = arith.constant 2.000000e-01 : f32
    %246 = vector.broadcast %cst_44 : f32 to vector<16x16xf32>
    %247 = arith.mulf %246, %245 : vector<16x16xf32>
    %248 = arith.maximumf %245, %247 : vector<16x16xf32>
    %249 = vector.extract_strided_slice %8 {offsets = [0, 16], sizes = [1, 1], strides = [1, 1]} : vector<1x32xf32> to vector<1x1xf32>
    %250 = vector.broadcast %249 : vector<1x1xf32> to vector<16x16xf32>
    %251 = arith.mulf %250, %248 : vector<16x16xf32>
    %252 = arith.addf %240, %251 : vector<16x16xf32>
    %253 = vector.extract_strided_slice %14 {offsets = [0, 17], sizes = [16, 1], strides = [1, 1]} : vector<16x32xf32> to vector<16x1xf32>
    %254 = vector.extract_strided_slice %15 {offsets = [17, 0], sizes = [1, 16], strides = [1, 1]} : vector<32x16xf32> to vector<1x16xf32>
    %255 = vector.broadcast %253 : vector<16x1xf32> to vector<16x16xf32>
    %256 = vector.broadcast %254 : vector<1x16xf32> to vector<16x16xf32>
    %257 = arith.addf %255, %256 : vector<16x16xf32>
    %cst_45 = arith.constant 2.000000e-01 : f32
    %258 = vector.broadcast %cst_45 : f32 to vector<16x16xf32>
    %259 = arith.mulf %258, %257 : vector<16x16xf32>
    %260 = arith.maximumf %257, %259 : vector<16x16xf32>
    %261 = vector.extract_strided_slice %8 {offsets = [0, 17], sizes = [1, 1], strides = [1, 1]} : vector<1x32xf32> to vector<1x1xf32>
    %262 = vector.broadcast %261 : vector<1x1xf32> to vector<16x16xf32>
    %263 = arith.mulf %262, %260 : vector<16x16xf32>
    %264 = arith.addf %252, %263 : vector<16x16xf32>
    %265 = vector.extract_strided_slice %14 {offsets = [0, 18], sizes = [16, 1], strides = [1, 1]} : vector<16x32xf32> to vector<16x1xf32>
    %266 = vector.extract_strided_slice %15 {offsets = [18, 0], sizes = [1, 16], strides = [1, 1]} : vector<32x16xf32> to vector<1x16xf32>
    %267 = vector.broadcast %265 : vector<16x1xf32> to vector<16x16xf32>
    %268 = vector.broadcast %266 : vector<1x16xf32> to vector<16x16xf32>
    %269 = arith.addf %267, %268 : vector<16x16xf32>
    %cst_46 = arith.constant 2.000000e-01 : f32
    %270 = vector.broadcast %cst_46 : f32 to vector<16x16xf32>
    %271 = arith.mulf %270, %269 : vector<16x16xf32>
    %272 = arith.maximumf %269, %271 : vector<16x16xf32>
    %273 = vector.extract_strided_slice %8 {offsets = [0, 18], sizes = [1, 1], strides = [1, 1]} : vector<1x32xf32> to vector<1x1xf32>
    %274 = vector.broadcast %273 : vector<1x1xf32> to vector<16x16xf32>
    %275 = arith.mulf %274, %272 : vector<16x16xf32>
    %276 = arith.addf %264, %275 : vector<16x16xf32>
    %277 = vector.extract_strided_slice %14 {offsets = [0, 19], sizes = [16, 1], strides = [1, 1]} : vector<16x32xf32> to vector<16x1xf32>
    %278 = vector.extract_strided_slice %15 {offsets = [19, 0], sizes = [1, 16], strides = [1, 1]} : vector<32x16xf32> to vector<1x16xf32>
    %279 = vector.broadcast %277 : vector<16x1xf32> to vector<16x16xf32>
    %280 = vector.broadcast %278 : vector<1x16xf32> to vector<16x16xf32>
    %281 = arith.addf %279, %280 : vector<16x16xf32>
    %cst_47 = arith.constant 2.000000e-01 : f32
    %282 = vector.broadcast %cst_47 : f32 to vector<16x16xf32>
    %283 = arith.mulf %282, %281 : vector<16x16xf32>
    %284 = arith.maximumf %281, %283 : vector<16x16xf32>
    %285 = vector.extract_strided_slice %8 {offsets = [0, 19], sizes = [1, 1], strides = [1, 1]} : vector<1x32xf32> to vector<1x1xf32>
    %286 = vector.broadcast %285 : vector<1x1xf32> to vector<16x16xf32>
    %287 = arith.mulf %286, %284 : vector<16x16xf32>
    %288 = arith.addf %276, %287 : vector<16x16xf32>
    %289 = vector.extract_strided_slice %14 {offsets = [0, 20], sizes = [16, 1], strides = [1, 1]} : vector<16x32xf32> to vector<16x1xf32>
    %290 = vector.extract_strided_slice %15 {offsets = [20, 0], sizes = [1, 16], strides = [1, 1]} : vector<32x16xf32> to vector<1x16xf32>
    %291 = vector.broadcast %289 : vector<16x1xf32> to vector<16x16xf32>
    %292 = vector.broadcast %290 : vector<1x16xf32> to vector<16x16xf32>
    %293 = arith.addf %291, %292 : vector<16x16xf32>
    %cst_48 = arith.constant 2.000000e-01 : f32
    %294 = vector.broadcast %cst_48 : f32 to vector<16x16xf32>
    %295 = arith.mulf %294, %293 : vector<16x16xf32>
    %296 = arith.maximumf %293, %295 : vector<16x16xf32>
    %297 = vector.extract_strided_slice %8 {offsets = [0, 20], sizes = [1, 1], strides = [1, 1]} : vector<1x32xf32> to vector<1x1xf32>
    %298 = vector.broadcast %297 : vector<1x1xf32> to vector<16x16xf32>
    %299 = arith.mulf %298, %296 : vector<16x16xf32>
    %300 = arith.addf %288, %299 : vector<16x16xf32>
    %301 = vector.extract_strided_slice %14 {offsets = [0, 21], sizes = [16, 1], strides = [1, 1]} : vector<16x32xf32> to vector<16x1xf32>
    %302 = vector.extract_strided_slice %15 {offsets = [21, 0], sizes = [1, 16], strides = [1, 1]} : vector<32x16xf32> to vector<1x16xf32>
    %303 = vector.broadcast %301 : vector<16x1xf32> to vector<16x16xf32>
    %304 = vector.broadcast %302 : vector<1x16xf32> to vector<16x16xf32>
    %305 = arith.addf %303, %304 : vector<16x16xf32>
    %cst_49 = arith.constant 2.000000e-01 : f32
    %306 = vector.broadcast %cst_49 : f32 to vector<16x16xf32>
    %307 = arith.mulf %306, %305 : vector<16x16xf32>
    %308 = arith.maximumf %305, %307 : vector<16x16xf32>
    %309 = vector.extract_strided_slice %8 {offsets = [0, 21], sizes = [1, 1], strides = [1, 1]} : vector<1x32xf32> to vector<1x1xf32>
    %310 = vector.broadcast %309 : vector<1x1xf32> to vector<16x16xf32>
    %311 = arith.mulf %310, %308 : vector<16x16xf32>
    %312 = arith.addf %300, %311 : vector<16x16xf32>
    %313 = vector.extract_strided_slice %14 {offsets = [0, 22], sizes = [16, 1], strides = [1, 1]} : vector<16x32xf32> to vector<16x1xf32>
    %314 = vector.extract_strided_slice %15 {offsets = [22, 0], sizes = [1, 16], strides = [1, 1]} : vector<32x16xf32> to vector<1x16xf32>
    %315 = vector.broadcast %313 : vector<16x1xf32> to vector<16x16xf32>
    %316 = vector.broadcast %314 : vector<1x16xf32> to vector<16x16xf32>
    %317 = arith.addf %315, %316 : vector<16x16xf32>
    %cst_50 = arith.constant 2.000000e-01 : f32
    %318 = vector.broadcast %cst_50 : f32 to vector<16x16xf32>
    %319 = arith.mulf %318, %317 : vector<16x16xf32>
    %320 = arith.maximumf %317, %319 : vector<16x16xf32>
    %321 = vector.extract_strided_slice %8 {offsets = [0, 22], sizes = [1, 1], strides = [1, 1]} : vector<1x32xf32> to vector<1x1xf32>
    %322 = vector.broadcast %321 : vector<1x1xf32> to vector<16x16xf32>
    %323 = arith.mulf %322, %320 : vector<16x16xf32>
    %324 = arith.addf %312, %323 : vector<16x16xf32>
    %325 = vector.extract_strided_slice %14 {offsets = [0, 23], sizes = [16, 1], strides = [1, 1]} : vector<16x32xf32> to vector<16x1xf32>
    %326 = vector.extract_strided_slice %15 {offsets = [23, 0], sizes = [1, 16], strides = [1, 1]} : vector<32x16xf32> to vector<1x16xf32>
    %327 = vector.broadcast %325 : vector<16x1xf32> to vector<16x16xf32>
    %328 = vector.broadcast %326 : vector<1x16xf32> to vector<16x16xf32>
    %329 = arith.addf %327, %328 : vector<16x16xf32>
    %cst_51 = arith.constant 2.000000e-01 : f32
    %330 = vector.broadcast %cst_51 : f32 to vector<16x16xf32>
    %331 = arith.mulf %330, %329 : vector<16x16xf32>
    %332 = arith.maximumf %329, %331 : vector<16x16xf32>
    %333 = vector.extract_strided_slice %8 {offsets = [0, 23], sizes = [1, 1], strides = [1, 1]} : vector<1x32xf32> to vector<1x1xf32>
    %334 = vector.broadcast %333 : vector<1x1xf32> to vector<16x16xf32>
    %335 = arith.mulf %334, %332 : vector<16x16xf32>
    %336 = arith.addf %324, %335 : vector<16x16xf32>
    %cst_52 = arith.constant -1.000000e+30 : f32
    %337 = vector.broadcast %cst_52 : f32 to vector<16x16xf32>
    %338 = arith.select %3, %336, %337 : vector<16x16xi1>, vector<16x16xf32>
    %cst_53 = arith.constant dense<0xFF800000> : vector<16xf32>
    %339 = vector.multi_reduction <maximumf>, %338, %cst_53 [1] : vector<16x16xf32> to vector<16xf32>
    %340 = vector.shape_cast %339 : vector<16xf32> to vector<16x1xf32>
    %341 = vector.broadcast %340 : vector<16x1xf32> to vector<16x16xf32>
    %342 = arith.subf %338, %341 : vector<16x16xf32>
    %343 = math.exp %342 : vector<16x16xf32>
    %cst_54 = arith.constant 0.000000e+00 : f32
    %344 = vector.broadcast %cst_54 : f32 to vector<16x16xf32>
    %345 = arith.select %3, %343, %344 : vector<16x16xi1>, vector<16x16xf32>
    %cst_55 = arith.constant dense<0.000000e+00> : vector<16xf32>
    %346 = vector.multi_reduction <add>, %345, %cst_55 [1] : vector<16x16xf32> to vector<16xf32>
    %347 = vector.shape_cast %346 : vector<16xf32> to vector<16x1xf32>
    %348 = vector.broadcast %347 : vector<16x1xf32> to vector<16x16xf32>
    %349 = arith.divf %345, %348 : vector<16x16xf32>
    %350 = vector.extract_strided_slice %11 {offsets = [0, 16], sizes = [16, 8], strides = [1, 1]} : vector<16x32xf32> to vector<16x8xf32>
    %cst_56 = arith.constant dense<0.000000e+00> : vector<16x8xf32>
    %351 = tpu.matmul %349, %350, %cst_56 {dimension_numbers = #tpu.dot_dimension_numbers<[1], [0], [0], [1], [0, 0, 1, 1], [], []>} : vector<16x16xf32>, vector<16x8xf32>, vector<16x8xf32> -> vector<16x8xf32>
    %cst_57 = arith.constant 0.000000e+00 : f32
    %352 = vector.broadcast %cst_57 : f32 to vector<16x16xf32>
    %353 = vector.extract_strided_slice %14 {offsets = [0, 24], sizes = [16, 1], strides = [1, 1]} : vector<16x32xf32> to vector<16x1xf32>
    %354 = vector.extract_strided_slice %15 {offsets = [24, 0], sizes = [1, 16], strides = [1, 1]} : vector<32x16xf32> to vector<1x16xf32>
    %355 = vector.broadcast %353 : vector<16x1xf32> to vector<16x16xf32>
    %356 = vector.broadcast %354 : vector<1x16xf32> to vector<16x16xf32>
    %357 = arith.addf %355, %356 : vector<16x16xf32>
    %cst_58 = arith.constant 2.000000e-01 : f32
    %358 = vector.broadcast %cst_58 : f32 to vector<16x16xf32>
    %359 = arith.mulf %358, %357 : vector<16x16xf32>
    %360 = arith.maximumf %357, %359 : vector<16x16xf32>
    %361 = vector.extract_strided_slice %8 {offsets = [0, 24], sizes = [1, 1], strides = [1, 1]} : vector<1x32xf32> to vector<1x1xf32>
    %362 = vector.broadcast %361 : vector<1x1xf32> to vector<16x16xf32>
    %363 = arith.mulf %362, %360 : vector<16x16xf32>
    %364 = arith.addf %352, %363 : vector<16x16xf32>
    %365 = vector.extract_strided_slice %14 {offsets = [0, 25], sizes = [16, 1], strides = [1, 1]} : vector<16x32xf32> to vector<16x1xf32>
    %366 = vector.extract_strided_slice %15 {offsets = [25, 0], sizes = [1, 16], strides = [1, 1]} : vector<32x16xf32> to vector<1x16xf32>
    %367 = vector.broadcast %365 : vector<16x1xf32> to vector<16x16xf32>
    %368 = vector.broadcast %366 : vector<1x16xf32> to vector<16x16xf32>
    %369 = arith.addf %367, %368 : vector<16x16xf32>
    %cst_59 = arith.constant 2.000000e-01 : f32
    %370 = vector.broadcast %cst_59 : f32 to vector<16x16xf32>
    %371 = arith.mulf %370, %369 : vector<16x16xf32>
    %372 = arith.maximumf %369, %371 : vector<16x16xf32>
    %373 = vector.extract_strided_slice %8 {offsets = [0, 25], sizes = [1, 1], strides = [1, 1]} : vector<1x32xf32> to vector<1x1xf32>
    %374 = vector.broadcast %373 : vector<1x1xf32> to vector<16x16xf32>
    %375 = arith.mulf %374, %372 : vector<16x16xf32>
    %376 = arith.addf %364, %375 : vector<16x16xf32>
    %377 = vector.extract_strided_slice %14 {offsets = [0, 26], sizes = [16, 1], strides = [1, 1]} : vector<16x32xf32> to vector<16x1xf32>
    %378 = vector.extract_strided_slice %15 {offsets = [26, 0], sizes = [1, 16], strides = [1, 1]} : vector<32x16xf32> to vector<1x16xf32>
    %379 = vector.broadcast %377 : vector<16x1xf32> to vector<16x16xf32>
    %380 = vector.broadcast %378 : vector<1x16xf32> to vector<16x16xf32>
    %381 = arith.addf %379, %380 : vector<16x16xf32>
    %cst_60 = arith.constant 2.000000e-01 : f32
    %382 = vector.broadcast %cst_60 : f32 to vector<16x16xf32>
    %383 = arith.mulf %382, %381 : vector<16x16xf32>
    %384 = arith.maximumf %381, %383 : vector<16x16xf32>
    %385 = vector.extract_strided_slice %8 {offsets = [0, 26], sizes = [1, 1], strides = [1, 1]} : vector<1x32xf32> to vector<1x1xf32>
    %386 = vector.broadcast %385 : vector<1x1xf32> to vector<16x16xf32>
    %387 = arith.mulf %386, %384 : vector<16x16xf32>
    %388 = arith.addf %376, %387 : vector<16x16xf32>
    %389 = vector.extract_strided_slice %14 {offsets = [0, 27], sizes = [16, 1], strides = [1, 1]} : vector<16x32xf32> to vector<16x1xf32>
    %390 = vector.extract_strided_slice %15 {offsets = [27, 0], sizes = [1, 16], strides = [1, 1]} : vector<32x16xf32> to vector<1x16xf32>
    %391 = vector.broadcast %389 : vector<16x1xf32> to vector<16x16xf32>
    %392 = vector.broadcast %390 : vector<1x16xf32> to vector<16x16xf32>
    %393 = arith.addf %391, %392 : vector<16x16xf32>
    %cst_61 = arith.constant 2.000000e-01 : f32
    %394 = vector.broadcast %cst_61 : f32 to vector<16x16xf32>
    %395 = arith.mulf %394, %393 : vector<16x16xf32>
    %396 = arith.maximumf %393, %395 : vector<16x16xf32>
    %397 = vector.extract_strided_slice %8 {offsets = [0, 27], sizes = [1, 1], strides = [1, 1]} : vector<1x32xf32> to vector<1x1xf32>
    %398 = vector.broadcast %397 : vector<1x1xf32> to vector<16x16xf32>
    %399 = arith.mulf %398, %396 : vector<16x16xf32>
    %400 = arith.addf %388, %399 : vector<16x16xf32>
    %401 = vector.extract_strided_slice %14 {offsets = [0, 28], sizes = [16, 1], strides = [1, 1]} : vector<16x32xf32> to vector<16x1xf32>
    %402 = vector.extract_strided_slice %15 {offsets = [28, 0], sizes = [1, 16], strides = [1, 1]} : vector<32x16xf32> to vector<1x16xf32>
    %403 = vector.broadcast %401 : vector<16x1xf32> to vector<16x16xf32>
    %404 = vector.broadcast %402 : vector<1x16xf32> to vector<16x16xf32>
    %405 = arith.addf %403, %404 : vector<16x16xf32>
    %cst_62 = arith.constant 2.000000e-01 : f32
    %406 = vector.broadcast %cst_62 : f32 to vector<16x16xf32>
    %407 = arith.mulf %406, %405 : vector<16x16xf32>
    %408 = arith.maximumf %405, %407 : vector<16x16xf32>
    %409 = vector.extract_strided_slice %8 {offsets = [0, 28], sizes = [1, 1], strides = [1, 1]} : vector<1x32xf32> to vector<1x1xf32>
    %410 = vector.broadcast %409 : vector<1x1xf32> to vector<16x16xf32>
    %411 = arith.mulf %410, %408 : vector<16x16xf32>
    %412 = arith.addf %400, %411 : vector<16x16xf32>
    %413 = vector.extract_strided_slice %14 {offsets = [0, 29], sizes = [16, 1], strides = [1, 1]} : vector<16x32xf32> to vector<16x1xf32>
    %414 = vector.extract_strided_slice %15 {offsets = [29, 0], sizes = [1, 16], strides = [1, 1]} : vector<32x16xf32> to vector<1x16xf32>
    %415 = vector.broadcast %413 : vector<16x1xf32> to vector<16x16xf32>
    %416 = vector.broadcast %414 : vector<1x16xf32> to vector<16x16xf32>
    %417 = arith.addf %415, %416 : vector<16x16xf32>
    %cst_63 = arith.constant 2.000000e-01 : f32
    %418 = vector.broadcast %cst_63 : f32 to vector<16x16xf32>
    %419 = arith.mulf %418, %417 : vector<16x16xf32>
    %420 = arith.maximumf %417, %419 : vector<16x16xf32>
    %421 = vector.extract_strided_slice %8 {offsets = [0, 29], sizes = [1, 1], strides = [1, 1]} : vector<1x32xf32> to vector<1x1xf32>
    %422 = vector.broadcast %421 : vector<1x1xf32> to vector<16x16xf32>
    %423 = arith.mulf %422, %420 : vector<16x16xf32>
    %424 = arith.addf %412, %423 : vector<16x16xf32>
    %425 = vector.extract_strided_slice %14 {offsets = [0, 30], sizes = [16, 1], strides = [1, 1]} : vector<16x32xf32> to vector<16x1xf32>
    %426 = vector.extract_strided_slice %15 {offsets = [30, 0], sizes = [1, 16], strides = [1, 1]} : vector<32x16xf32> to vector<1x16xf32>
    %427 = vector.broadcast %425 : vector<16x1xf32> to vector<16x16xf32>
    %428 = vector.broadcast %426 : vector<1x16xf32> to vector<16x16xf32>
    %429 = arith.addf %427, %428 : vector<16x16xf32>
    %cst_64 = arith.constant 2.000000e-01 : f32
    %430 = vector.broadcast %cst_64 : f32 to vector<16x16xf32>
    %431 = arith.mulf %430, %429 : vector<16x16xf32>
    %432 = arith.maximumf %429, %431 : vector<16x16xf32>
    %433 = vector.extract_strided_slice %8 {offsets = [0, 30], sizes = [1, 1], strides = [1, 1]} : vector<1x32xf32> to vector<1x1xf32>
    %434 = vector.broadcast %433 : vector<1x1xf32> to vector<16x16xf32>
    %435 = arith.mulf %434, %432 : vector<16x16xf32>
    %436 = arith.addf %424, %435 : vector<16x16xf32>
    %437 = vector.extract_strided_slice %14 {offsets = [0, 31], sizes = [16, 1], strides = [1, 1]} : vector<16x32xf32> to vector<16x1xf32>
    %438 = vector.extract_strided_slice %15 {offsets = [31, 0], sizes = [1, 16], strides = [1, 1]} : vector<32x16xf32> to vector<1x16xf32>
    %439 = vector.broadcast %437 : vector<16x1xf32> to vector<16x16xf32>
    %440 = vector.broadcast %438 : vector<1x16xf32> to vector<16x16xf32>
    %441 = arith.addf %439, %440 : vector<16x16xf32>
    %cst_65 = arith.constant 2.000000e-01 : f32
    %442 = vector.broadcast %cst_65 : f32 to vector<16x16xf32>
    %443 = arith.mulf %442, %441 : vector<16x16xf32>
    %444 = arith.maximumf %441, %443 : vector<16x16xf32>
    %445 = vector.extract_strided_slice %8 {offsets = [0, 31], sizes = [1, 1], strides = [1, 1]} : vector<1x32xf32> to vector<1x1xf32>
    %446 = vector.broadcast %445 : vector<1x1xf32> to vector<16x16xf32>
    %447 = arith.mulf %446, %444 : vector<16x16xf32>
    %448 = arith.addf %436, %447 : vector<16x16xf32>
    %cst_66 = arith.constant -1.000000e+30 : f32
    %449 = vector.broadcast %cst_66 : f32 to vector<16x16xf32>
    %450 = arith.select %3, %448, %449 : vector<16x16xi1>, vector<16x16xf32>
    %cst_67 = arith.constant dense<0xFF800000> : vector<16xf32>
    %451 = vector.multi_reduction <maximumf>, %450, %cst_67 [1] : vector<16x16xf32> to vector<16xf32>
    %452 = vector.shape_cast %451 : vector<16xf32> to vector<16x1xf32>
    %453 = vector.broadcast %452 : vector<16x1xf32> to vector<16x16xf32>
    %454 = arith.subf %450, %453 : vector<16x16xf32>
    %455 = math.exp %454 : vector<16x16xf32>
    %cst_68 = arith.constant 0.000000e+00 : f32
    %456 = vector.broadcast %cst_68 : f32 to vector<16x16xf32>
    %457 = arith.select %3, %455, %456 : vector<16x16xi1>, vector<16x16xf32>
    %cst_69 = arith.constant dense<0.000000e+00> : vector<16xf32>
    %458 = vector.multi_reduction <add>, %457, %cst_69 [1] : vector<16x16xf32> to vector<16xf32>
    %459 = vector.shape_cast %458 : vector<16xf32> to vector<16x1xf32>
    %460 = vector.broadcast %459 : vector<16x1xf32> to vector<16x16xf32>
    %461 = arith.divf %457, %460 : vector<16x16xf32>
    %462 = vector.extract_strided_slice %11 {offsets = [0, 24], sizes = [16, 8], strides = [1, 1]} : vector<16x32xf32> to vector<16x8xf32>
    %cst_70 = arith.constant dense<0.000000e+00> : vector<16x8xf32>
    %463 = tpu.matmul %461, %462, %cst_70 {dimension_numbers = #tpu.dot_dimension_numbers<[1], [0], [0], [1], [0, 0, 1, 1], [], []>} : vector<16x16xf32>, vector<16x8xf32>, vector<16x8xf32> -> vector<16x8xf32>
    %c0_71 = arith.constant 0 : index
    %c0_72 = arith.constant 0 : index
    %464 = vector.load %arg8[%c0_71, %c0_72] : memref<1x32xf32, #tpu.memory_space<vmem>>, vector<1x8xf32>
    %465 = vector.broadcast %464 : vector<1x8xf32> to vector<16x8xf32>
    %466 = arith.addf %127, %465 : vector<16x8xf32>
    %cst_73 = arith.constant 0.000000e+00 : f32
    %467 = vector.broadcast %cst_73 : f32 to vector<16x8xf32>
    %468 = arith.cmpf ogt, %466, %467 : vector<16x8xf32>
    %469 = math.exp %466 : vector<16x8xf32>
    %cst_74 = arith.constant 1.000000e+00 : f32
    %470 = vector.broadcast %cst_74 : f32 to vector<16x8xf32>
    %471 = arith.subf %469, %470 : vector<16x8xf32>
    %472 = arith.select %468, %466, %471 : vector<16x8xi1>, vector<16x8xf32>
    %c0_75 = arith.constant 0 : index
    %c0_76 = arith.constant 0 : index
    %473 = vector.load %arg16[%c0_75, %c0_76] : memref<16x32xf32, #tpu.memory_space<vmem>>, vector<16x8xf32>
    tpu.vector_store %arg16[%c0_75, %c0_76], %472 {strides = array<i32>} : memref<16x32xf32, #tpu.memory_space<vmem>>, vector<16x8xf32>,
    %c0_77 = arith.constant 0 : index
    %c8 = arith.constant 8 : index
    %474 = vector.load %arg8[%c0_77, %c8] : memref<1x32xf32, #tpu.memory_space<vmem>>, vector<1x8xf32>
    %475 = vector.broadcast %474 : vector<1x8xf32> to vector<16x8xf32>
    %476 = arith.addf %239, %475 : vector<16x8xf32>
    %cst_78 = arith.constant 0.000000e+00 : f32
    %477 = vector.broadcast %cst_78 : f32 to vector<16x8xf32>
    %478 = arith.cmpf ogt, %476, %477 : vector<16x8xf32>
    %479 = math.exp %476 : vector<16x8xf32>
    %cst_79 = arith.constant 1.000000e+00 : f32
    %480 = vector.broadcast %cst_79 : f32 to vector<16x8xf32>
    %481 = arith.subf %479, %480 : vector<16x8xf32>
    %482 = arith.select %478, %476, %481 : vector<16x8xi1>, vector<16x8xf32>
    %c0_80 = arith.constant 0 : index
    %c8_81 = arith.constant 8 : index
    %483 = vector.load %arg16[%c0_80, %c8_81] : memref<16x32xf32, #tpu.memory_space<vmem>>, vector<16x8xf32>
    tpu.vector_store %arg16[%c0_80, %c8_81], %482 {strides = array<i32>} : memref<16x32xf32, #tpu.memory_space<vmem>>, vector<16x8xf32>,
    %c0_82 = arith.constant 0 : index
    %c16 = arith.constant 16 : index
    %484 = vector.load %arg8[%c0_82, %c16] : memref<1x32xf32, #tpu.memory_space<vmem>>, vector<1x8xf32>
    %485 = vector.broadcast %484 : vector<1x8xf32> to vector<16x8xf32>
    %486 = arith.addf %351, %485 : vector<16x8xf32>
    %cst_83 = arith.constant 0.000000e+00 : f32
    %487 = vector.broadcast %cst_83 : f32 to vector<16x8xf32>
    %488 = arith.cmpf ogt, %486, %487 : vector<16x8xf32>
    %489 = math.exp %486 : vector<16x8xf32>
    %cst_84 = arith.constant 1.000000e+00 : f32
    %490 = vector.broadcast %cst_84 : f32 to vector<16x8xf32>
    %491 = arith.subf %489, %490 : vector<16x8xf32>
    %492 = arith.select %488, %486, %491 : vector<16x8xi1>, vector<16x8xf32>
    %c0_85 = arith.constant 0 : index
    %c16_86 = arith.constant 16 : index
    %493 = vector.load %arg16[%c0_85, %c16_86] : memref<16x32xf32, #tpu.memory_space<vmem>>, vector<16x8xf32>
    tpu.vector_store %arg16[%c0_85, %c16_86], %492 {strides = array<i32>} : memref<16x32xf32, #tpu.memory_space<vmem>>, vector<16x8xf32>,
    %c0_87 = arith.constant 0 : index
    %c24 = arith.constant 24 : index
    %494 = vector.load %arg8[%c0_87, %c24] : memref<1x32xf32, #tpu.memory_space<vmem>>, vector<1x8xf32>
    %495 = vector.broadcast %494 : vector<1x8xf32> to vector<16x8xf32>
    %496 = arith.addf %463, %495 : vector<16x8xf32>
    %cst_88 = arith.constant 0.000000e+00 : f32
    %497 = vector.broadcast %cst_88 : f32 to vector<16x8xf32>
    %498 = arith.cmpf ogt, %496, %497 : vector<16x8xf32>
    %499 = math.exp %496 : vector<16x8xf32>
    %cst_89 = arith.constant 1.000000e+00 : f32
    %500 = vector.broadcast %cst_89 : f32 to vector<16x8xf32>
    %501 = arith.subf %499, %500 : vector<16x8xf32>
    %502 = arith.select %498, %496, %501 : vector<16x8xi1>, vector<16x8xf32>
    %c0_90 = arith.constant 0 : index
    %c24_91 = arith.constant 24 : index
    %503 = vector.load %arg16[%c0_90, %c24_91] : memref<16x32xf32, #tpu.memory_space<vmem>>, vector<16x8xf32>
    tpu.vector_store %arg16[%c0_90, %c24_91], %502 {strides = array<i32>} : memref<16x32xf32, #tpu.memory_space<vmem>>, vector<16x8xf32>,
    %c0_92 = arith.constant 0 : index
    %c0_93 = arith.constant 0 : index
    %504 = vector.load %arg16[%c0_92, %c0_93] : memref<16x32xf32, #tpu.memory_space<vmem>>, vector<16x32xf32>
    %c0_94 = arith.constant 0 : index
    %c0_95 = arith.constant 0 : index
    %505 = vector.load %arg9[%c0_94, %c0_95] : memref<32x4xf32, #tpu.memory_space<vmem>>, vector<32x4xf32>
    %c0_96 = arith.constant 0 : index
    %c0_97 = arith.constant 0 : index
    %506 = vector.load %arg10[%c0_96, %c0_97] : memref<32x4xf32, #tpu.memory_space<vmem>>, vector<32x4xf32>
    %c0_98 = arith.constant 0 : index
    %c0_99 = arith.constant 0 : index
    %507 = vector.load %arg11[%c0_98, %c0_99] : memref<1x4xf32, #tpu.memory_space<vmem>>, vector<1x4xf32>
    %c0_100 = arith.constant 0 : index
    %c0_101 = arith.constant 0 : index
    %508 = vector.load %arg12[%c0_100, %c0_101] : memref<1x4xf32, #tpu.memory_space<vmem>>, vector<1x4xf32>
    %c0_102 = arith.constant 0 : index
    %c0_103 = arith.constant 0 : index
    %509 = vector.load %arg13[%c0_102, %c0_103] : memref<1x4xf32, #tpu.memory_space<vmem>>, vector<1x4xf32>
    %cst_104 = arith.constant dense<0.000000e+00> : vector<16x4xf32>
    %510 = tpu.matmul %504, %505, %cst_104 {dimension_numbers = #tpu.dot_dimension_numbers<[1], [0], [0], [1], [0, 0, 1, 1], [], []>} : vector<16x32xf32>, vector<32x4xf32>, vector<16x4xf32> -> vector<16x4xf32>
    %511 = vector.broadcast %507 : vector<1x4xf32> to vector<16x4xf32>
    %512 = arith.addf %510, %511 : vector<16x4xf32>
    %cst_105 = arith.constant dense<0.000000e+00> : vector<16x4xf32>
    %513 = tpu.matmul %504, %506, %cst_105 {dimension_numbers = #tpu.dot_dimension_numbers<[1], [0], [0], [1], [0, 0, 1, 1], [], []>} : vector<16x32xf32>, vector<32x4xf32>, vector<16x4xf32> -> vector<16x4xf32>
    %514 = vector.broadcast %508 : vector<1x4xf32> to vector<16x4xf32>
    %515 = arith.addf %513, %514 : vector<16x4xf32>
    %516 = tpu.transpose %512, [1, 0] : vector<16x4xf32> -> vector<4x16xf32>
    %cst_106 = arith.constant 0.000000e+00 : f32
    %517 = vector.broadcast %cst_106 : f32 to vector<16x16xf32>
    %518 = vector.extract_strided_slice %515 {offsets = [0, 0], sizes = [16, 1], strides = [1, 1]} : vector<16x4xf32> to vector<16x1xf32>
    %519 = vector.extract_strided_slice %516 {offsets = [0, 0], sizes = [1, 16], strides = [1, 1]} : vector<4x16xf32> to vector<1x16xf32>
    %520 = vector.broadcast %518 : vector<16x1xf32> to vector<16x16xf32>
    %521 = vector.broadcast %519 : vector<1x16xf32> to vector<16x16xf32>
    %522 = arith.addf %520, %521 : vector<16x16xf32>
    %cst_107 = arith.constant 2.000000e-01 : f32
    %523 = vector.broadcast %cst_107 : f32 to vector<16x16xf32>
    %524 = arith.mulf %523, %522 : vector<16x16xf32>
    %525 = arith.maximumf %522, %524 : vector<16x16xf32>
    %526 = vector.extract_strided_slice %509 {offsets = [0, 0], sizes = [1, 1], strides = [1, 1]} : vector<1x4xf32> to vector<1x1xf32>
    %527 = vector.broadcast %526 : vector<1x1xf32> to vector<16x16xf32>
    %528 = arith.mulf %527, %525 : vector<16x16xf32>
    %529 = arith.addf %517, %528 : vector<16x16xf32>
    %530 = vector.extract_strided_slice %515 {offsets = [0, 1], sizes = [16, 1], strides = [1, 1]} : vector<16x4xf32> to vector<16x1xf32>
    %531 = vector.extract_strided_slice %516 {offsets = [1, 0], sizes = [1, 16], strides = [1, 1]} : vector<4x16xf32> to vector<1x16xf32>
    %532 = vector.broadcast %530 : vector<16x1xf32> to vector<16x16xf32>
    %533 = vector.broadcast %531 : vector<1x16xf32> to vector<16x16xf32>
    %534 = arith.addf %532, %533 : vector<16x16xf32>
    %cst_108 = arith.constant 2.000000e-01 : f32
    %535 = vector.broadcast %cst_108 : f32 to vector<16x16xf32>
    %536 = arith.mulf %535, %534 : vector<16x16xf32>
    %537 = arith.maximumf %534, %536 : vector<16x16xf32>
    %538 = vector.extract_strided_slice %509 {offsets = [0, 1], sizes = [1, 1], strides = [1, 1]} : vector<1x4xf32> to vector<1x1xf32>
    %539 = vector.broadcast %538 : vector<1x1xf32> to vector<16x16xf32>
    %540 = arith.mulf %539, %537 : vector<16x16xf32>
    %541 = arith.addf %529, %540 : vector<16x16xf32>
    %542 = vector.extract_strided_slice %515 {offsets = [0, 2], sizes = [16, 1], strides = [1, 1]} : vector<16x4xf32> to vector<16x1xf32>
    %543 = vector.extract_strided_slice %516 {offsets = [2, 0], sizes = [1, 16], strides = [1, 1]} : vector<4x16xf32> to vector<1x16xf32>
    %544 = vector.broadcast %542 : vector<16x1xf32> to vector<16x16xf32>
    %545 = vector.broadcast %543 : vector<1x16xf32> to vector<16x16xf32>
    %546 = arith.addf %544, %545 : vector<16x16xf32>
    %cst_109 = arith.constant 2.000000e-01 : f32
    %547 = vector.broadcast %cst_109 : f32 to vector<16x16xf32>
    %548 = arith.mulf %547, %546 : vector<16x16xf32>
    %549 = arith.maximumf %546, %548 : vector<16x16xf32>
    %550 = vector.extract_strided_slice %509 {offsets = [0, 2], sizes = [1, 1], strides = [1, 1]} : vector<1x4xf32> to vector<1x1xf32>
    %551 = vector.broadcast %550 : vector<1x1xf32> to vector<16x16xf32>
    %552 = arith.mulf %551, %549 : vector<16x16xf32>
    %553 = arith.addf %541, %552 : vector<16x16xf32>
    %554 = vector.extract_strided_slice %515 {offsets = [0, 3], sizes = [16, 1], strides = [1, 1]} : vector<16x4xf32> to vector<16x1xf32>
    %555 = vector.extract_strided_slice %516 {offsets = [3, 0], sizes = [1, 16], strides = [1, 1]} : vector<4x16xf32> to vector<1x16xf32>
    %556 = vector.broadcast %554 : vector<16x1xf32> to vector<16x16xf32>
    %557 = vector.broadcast %555 : vector<1x16xf32> to vector<16x16xf32>
    %558 = arith.addf %556, %557 : vector<16x16xf32>
    %cst_110 = arith.constant 2.000000e-01 : f32
    %559 = vector.broadcast %cst_110 : f32 to vector<16x16xf32>
    %560 = arith.mulf %559, %558 : vector<16x16xf32>
    %561 = arith.maximumf %558, %560 : vector<16x16xf32>
    %562 = vector.extract_strided_slice %509 {offsets = [0, 3], sizes = [1, 1], strides = [1, 1]} : vector<1x4xf32> to vector<1x1xf32>
    %563 = vector.broadcast %562 : vector<1x1xf32> to vector<16x16xf32>
    %564 = arith.mulf %563, %561 : vector<16x16xf32>
    %565 = arith.addf %553, %564 : vector<16x16xf32>
    %cst_111 = arith.constant -1.000000e+30 : f32
    %566 = vector.broadcast %cst_111 : f32 to vector<16x16xf32>
    %567 = arith.select %3, %565, %566 : vector<16x16xi1>, vector<16x16xf32>
    %cst_112 = arith.constant dense<0xFF800000> : vector<16xf32>
    %568 = vector.multi_reduction <maximumf>, %567, %cst_112 [1] : vector<16x16xf32> to vector<16xf32>
    %569 = vector.shape_cast %568 : vector<16xf32> to vector<16x1xf32>
    %570 = vector.broadcast %569 : vector<16x1xf32> to vector<16x16xf32>
    %571 = arith.subf %567, %570 : vector<16x16xf32>
    %572 = math.exp %571 : vector<16x16xf32>
    %cst_113 = arith.constant 0.000000e+00 : f32
    %573 = vector.broadcast %cst_113 : f32 to vector<16x16xf32>
    %574 = arith.select %3, %572, %573 : vector<16x16xi1>, vector<16x16xf32>
    %cst_114 = arith.constant dense<0.000000e+00> : vector<16xf32>
    %575 = vector.multi_reduction <add>, %574, %cst_114 [1] : vector<16x16xf32> to vector<16xf32>
    %576 = vector.shape_cast %575 : vector<16xf32> to vector<16x1xf32>
    %577 = vector.broadcast %576 : vector<16x1xf32> to vector<16x16xf32>
    %578 = arith.divf %574, %577 : vector<16x16xf32>
    %cst_115 = arith.constant dense<0.000000e+00> : vector<16x4xf32>
    %579 = tpu.matmul %578, %512, %cst_115 {dimension_numbers = #tpu.dot_dimension_numbers<[1], [0], [0], [1], [0, 0, 1, 1], [], []>} : vector<16x16xf32>, vector<16x4xf32>, vector<16x4xf32> -> vector<16x4xf32>
    %c0_116 = arith.constant 0 : index
    %c0_117 = arith.constant 0 : index
    %580 = vector.load %arg14[%c0_116, %c0_117] : memref<1x4xf32, #tpu.memory_space<vmem>>, vector<1x4xf32>
    %581 = vector.broadcast %580 : vector<1x4xf32> to vector<16x4xf32>
    %582 = arith.addf %579, %581 : vector<16x4xf32>
    %c0_118 = arith.constant 0 : index
    %c0_119 = arith.constant 0 : index
    %583 = vector.load %arg15[%c0_118, %c0_119] : memref<16x4xf32, #tpu.memory_space<vmem>>, vector<16x4xf32>
    tpu.vector_store %arg15[%c0_118, %c0_119], %582 {strides = array<i32>} : memref<16x4xf32, #tpu.memory_space<vmem>>, vector<16x4xf32>,
    return
  }
  func.func @transform_0(%arg0: i32) -> (i32, i32) {
    %c0_i32 = arith.constant 0 : i32
    %c0_i32_0 = arith.constant 0 : i32
    %c0_i32_1 = arith.constant 0 : i32
    return %c0_i32, %c0_i32_0 : i32, i32
  }
  func.func @transform_1(%arg0: i32) -> (i32, i32) {
    %c0_i32 = arith.constant 0 : i32
    %c0_i32_0 = arith.constant 0 : i32
    %c0_i32_1 = arith.constant 0 : i32
    return %c0_i32, %c0_i32_0 : i32, i32
  }
  func.func @transform_2(%arg0: i32) -> (i32, i32) {
    %c0_i32 = arith.constant 0 : i32
    %c0_i32_0 = arith.constant 0 : i32
    %c0_i32_1 = arith.constant 0 : i32
    return %c0_i32, %c0_i32_0 : i32, i32
  }
  func.func @transform_3(%arg0: i32) -> (i32, i32) {
    %c0_i32 = arith.constant 0 : i32
    %c0_i32_0 = arith.constant 0 : i32
    %c0_i32_1 = arith.constant 0 : i32
    return %c0_i32, %c0_i32_0 : i32, i32
  }
  func.func @transform_4(%arg0: i32) -> (i32, i32) {
    %c0_i32 = arith.constant 0 : i32
    %c0_i32_0 = arith.constant 0 : i32
    %c0_i32_1 = arith.constant 0 : i32
    return %c0_i32, %c0_i32_0 : i32, i32
  }
  func.func @transform_5(%arg0: i32) -> (i32, i32) {
    %c0_i32 = arith.constant 0 : i32
    %c0_i32_0 = arith.constant 0 : i32
    %c0_i32_1 = arith.constant 0 : i32
    return %c0_i32, %c0_i32_0 : i32, i32
  }
  func.func @transform_6(%arg0: i32) -> (i32, i32) {
    %c0_i32 = arith.constant 0 : i32
    %c0_i32_0 = arith.constant 0 : i32
    %c0_i32_1 = arith.constant 0 : i32
    return %c0_i32, %c0_i32_0 : i32, i32
  }
  func.func @transform_7(%arg0: i32) -> (i32, i32) {
    %c0_i32 = arith.constant 0 : i32
    %c0_i32_0 = arith.constant 0 : i32
    %c0_i32_1 = arith.constant 0 : i32
    return %c0_i32, %c0_i32_0 : i32, i32
  }
  func.func @transform_8(%arg0: i32) -> (i32, i32) {
    %c0_i32 = arith.constant 0 : i32
    %c0_i32_0 = arith.constant 0 : i32
    %c0_i32_1 = arith.constant 0 : i32
    return %c0_i32, %c0_i32_0 : i32, i32
  }
  func.func @transform_9(%arg0: i32) -> (i32, i32) {
    %c0_i32 = arith.constant 0 : i32
    %c0_i32_0 = arith.constant 0 : i32
    %c0_i32_1 = arith.constant 0 : i32
    return %c0_i32, %c0_i32_0 : i32, i32
  }
  func.func @transform_10(%arg0: i32) -> (i32, i32) {
    %c0_i32 = arith.constant 0 : i32
    %c0_i32_0 = arith.constant 0 : i32
    %c0_i32_1 = arith.constant 0 : i32
    return %c0_i32, %c0_i32_0 : i32, i32
  }
  func.func @transform_11(%arg0: i32) -> (i32, i32) {
    %c0_i32 = arith.constant 0 : i32
    %c0_i32_0 = arith.constant 0 : i32
    %c0_i32_1 = arith.constant 0 : i32
    return %c0_i32, %c0_i32_0 : i32, i32
  }
  func.func @transform_12(%arg0: i32) -> (i32, i32) {
    %c0_i32 = arith.constant 0 : i32
    %c0_i32_0 = arith.constant 0 : i32
    %c0_i32_1 = arith.constant 0 : i32
    return %c0_i32, %c0_i32_0 : i32, i32
  }
  func.func @transform_13(%arg0: i32) -> (i32, i32) {
    %c0_i32 = arith.constant 0 : i32
    %c0_i32_0 = arith.constant 0 : i32
    %c0_i32_1 = arith.constant 0 : i32
    return %c0_i32, %c0_i32_0 : i32, i32
  }
  func.func @transform_14(%arg0: i32) -> (i32, i32) {
    %c0_i32 = arith.constant 0 : i32
    %c0_i32_0 = arith.constant 0 : i32
    %c0_i32_1 = arith.constant 0 : i32
    return %c0_i32, %c0_i32_0 : i32, i32
  }
}

</mosaic_0001>

<llo_original>
// kernel: gatv2_node_gnn.1
$region0: #{gatv2_node_gnn.1}
  #allocation0 [shape = 'u32[]', space=smem, size = 0x4, offset = 0x4, fixed_abs, tag = 'smem constant byte address 0x4 - core index']
  #allocation1 [shape = 'u32[144,128]{1,0:T(1,128)}', space=vmem, size = 0x12000, scoped, tag = 'internal scratch']
  #allocation2 [shape = 'f32[16,32]{1,0:T(8,128)}', space=vmem, size = 0x2000, scoped, tag = 'scratch operand']
  %s0 = inlined_call_operand.vmem [shape: f32[16,8], index: 0, kind: input, shape index: {}]
  %s1 = inlined_call_operand.vmem [shape: f32[16,16], index: 1, kind: input, shape index: {}]
  %s2 = inlined_call_operand.vmem [shape: f32[8,32], index: 2, kind: input, shape index: {}]
  %s3 = inlined_call_operand.vmem [shape: f32[8,32], index: 3, kind: input, shape index: {}]
  %s4 = inlined_call_operand.vmem [shape: f32[1,32], index: 4, kind: input, shape index: {}]
  %s5 = inlined_call_operand.vmem [shape: f32[1,32], index: 5, kind: input, shape index: {}]
  %s6 = inlined_call_operand.vmem [shape: f32[1,32], index: 6, kind: input, shape index: {}]
  %s7 = inlined_call_operand.vmem [shape: f32[1,32], index: 7, kind: input, shape index: {}]
  %s8 = inlined_call_operand.vmem [shape: f32[32,4], index: 8, kind: input, shape index: {}]
  %s9 = inlined_call_operand.vmem [shape: f32[32,4], index: 9, kind: input, shape index: {}]
  %s10 = inlined_call_operand.vmem [shape: f32[1,4], index: 10, kind: input, shape index: {}]
  %s11 = inlined_call_operand.vmem [shape: f32[1,4], index: 11, kind: input, shape index: {}]
  %s12 = inlined_call_operand.vmem [shape: f32[1,4], index: 12, kind: input, shape index: {}]
  %s13 = inlined_call_operand.vmem [shape: f32[1,4], index: 13, kind: input, shape index: {}]
  %s14 = inlined_call_operand.vmem [shape: f32[16,4], index: 14, kind: output, shape index: {}]
  %s15 = sld [smem:[#allocation0]]
  $region66: #{gatv2_node_gnn.1} parent=0
    _
  %s17 = ssub.s32 1, %s15
  %s18 = scalar_select 0, %s17, %s15
  // Predicated region
  $region2: #{gatv2_node_gnn.1} parent=0 // pred_check
    _
  $region3: #{gatv2_node_gnn.1} parent=0 // pred_check_branch
    %20 = sbr.rel (0) target = $region5
  $region4: #{gatv2_node_gnn.1} parent=0 // pred_region
    _
  $region5: #{gatv2_node_gnn.1} parent=0 // pred_fallthru
    _
  // Predicated region
  $region6: #{gatv2_node_gnn.1} parent=0 // pred_check
    _
  $region7: #{gatv2_node_gnn.1} parent=0 // pred_check_branch
    %22 = sbr.rel (0) target = $region9
  $region8: #{gatv2_node_gnn.1} parent=0 // pred_region
    _
  $region9: #{gatv2_node_gnn.1} parent=0 // pred_fallthru
    _
  // Predicated region
  $region10: #{gatv2_node_gnn.1} parent=0 // pred_check
    _
  $region11: #{gatv2_node_gnn.1} parent=0 // pred_check_branch
    %24 = sbr.rel (0) target = $region13
  $region12: #{gatv2_node_gnn.1} parent=0 // pred_region
    _
  $region13: #{gatv2_node_gnn.1} parent=0 // pred_fallthru
    _
  // Predicated region
  $region14: #{gatv2_node_gnn.1} parent=0 // pred_check
    _
  $region15: #{gatv2_node_gnn.1} parent=0 // pred_check_branch
    %26 = sbr.rel (0) target = $region17
  $region16: #{gatv2_node_gnn.1} parent=0 // pred_region
    _
  $region17: #{gatv2_node_gnn.1} parent=0 // pred_fallthru
    _
  // Predicated region
  $region18: #{gatv2_node_gnn.1} parent=0 // pred_check
    _
  $region19: #{gatv2_node_gnn.1} parent=0 // pred_check_branch
    %28 = sbr.rel (0) target = $region21
  $region20: #{gatv2_node_gnn.1} parent=0 // pred_region
    _
  $region21: #{gatv2_node_gnn.1} parent=0 // pred_fallthru
    _
  // Predicated region
  $region22: #{gatv2_node_gnn.1} parent=0 // pred_check
    _
  $region23: #{gatv2_node_gnn.1} parent=0 // pred_check_branch
    %30 = sbr.rel (0) target = $region25
  $region24: #{gatv2_node_gnn.1} parent=0 // pred_region
    _
  $region25: #{gatv2_node_gnn.1} parent=0 // pred_fallthru
    _
  // Predicated region
  $region26: #{gatv2_node_gnn.1} parent=0 // pred_check
    _
  $region27: #{gatv2_node_gnn.1} parent=0 // pred_check_branch
    %32 = sbr.rel (0) target = $region29
  $region28: #{gatv2_node_gnn.1} parent=0 // pred_region
    _
  $region29: #{gatv2_node_gnn.1} parent=0 // pred_fallthru
    _
  // Predicated region
  $region30: #{gatv2_node_gnn.1} parent=0 // pred_check
    _
  $region31: #{gatv2_node_gnn.1} parent=0 // pred_check_branch
    %34 = sbr.rel (0) target = $region33
  $region32: #{gatv2_node_gnn.1} parent=0 // pred_region
    _
  $region33: #{gatv2_node_gnn.1} parent=0 // pred_fallthru
    _
  // Predicated region
  $region34: #{gatv2_node_gnn.1} parent=0 // pred_check
    _
  $region35: #{gatv2_node_gnn.1} parent=0 // pred_check_branch
    %36 = sbr.rel (0) target = $region37
  $region36: #{gatv2_node_gnn.1} parent=0 // pred_region
    _
  $region37: #{gatv2_node_gnn.1} parent=0 // pred_fallthru
    _
  // Predicated region
  $region38: #{gatv2_node_gnn.1} parent=0 // pred_check
    _
  $region39: #{gatv2_node_gnn.1} parent=0 // pred_check_branch
    %38 = sbr.rel (0) target = $region41
  $region40: #{gatv2_node_gnn.1} parent=0 // pred_region
    _
  $region41: #{gatv2_node_gnn.1} parent=0 // pred_fallthru
    _
  // Predicated region
  $region42: #{gatv2_node_gnn.1} parent=0 // pred_check
    _
  $region43: #{gatv2_node_gnn.1} parent=0 // pred_check_branch
    %40 = sbr.rel (0) target = $region45
  $region44: #{gatv2_node_gnn.1} parent=0 // pred_region
    _
  $region45: #{gatv2_node_gnn.1} parent=0 // pred_fallthru
    _
  // Predicated region
  $region46: #{gatv2_node_gnn.1} parent=0 // pred_check
    _
  $region47: #{gatv2_node_gnn.1} parent=0 // pred_check_branch
    %42 = sbr.rel (0) target = $region49
  $region48: #{gatv2_node_gnn.1} parent=0 // pred_region
    _
  $region49: #{gatv2_node_gnn.1} parent=0 // pred_fallthru
    _
  // Predicated region
  $region50: #{gatv2_node_gnn.1} parent=0 // pred_check
    _
  $region51: #{gatv2_node_gnn.1} parent=0 // pred_check_branch
    %44 = sbr.rel (0) target = $region53
  $region52: #{gatv2_node_gnn.1} parent=0 // pred_region
    _
  $region53: #{gatv2_node_gnn.1} parent=0 // pred_fallthru
    _
  // Predicated region
  $region54: #{gatv2_node_gnn.1} parent=0 // pred_check
    _
  $region55: #{gatv2_node_gnn.1} parent=0 // pred_check_branch
    %46 = sbr.rel (0) target = $region57
  $region56: #{gatv2_node_gnn.1} parent=0 // pred_region
    _
  $region57: #{gatv2_node_gnn.1} parent=0 // pred_fallthru
    _
  %v47 = vld [vmem:[%s0] sm:$0xff]
  %v48 = vld [vmem:[%s0 + $0x8] sm:$0xff]
  %v49 = vld [vmem:[%s1] sm:$0xff]
  %v50 = vld [vmem:[%s1 + $0x8] sm:$0xff]
  %vm51 = vcmp.gt.f32.partialorder %v49, 0.0
  %vm52 = vcmp.gt.f32.partialorder %v50, 0.0
  %v53 = vld [vmem:[%s2] sm:$0xff]
  %v54 = vld [vmem:[%s3] sm:$0xff]
  %v55 = vld [vmem:[%s4] sm:$0x1]
  %v56 = vld [vmem:[%s5] sm:$0x1]
  %v57 = vld [vmem:[%s6] sm:$0x1]
  %v59 = vlaneseq
  %v60 = vshrl.u32 %v59, 7
  %v61 = vsub.s32 0, %v60
  %v62 = vrot.slane %v55, %v61
  %vm64 = vcmask 64512
  %v66 = vsel %vm64, %v47, 0
  %v69 = vsel %vm64, %v48, 0
  %71 = vmatprep.subr.mxu0 0.0
  %72 = vmatpush1.msra.mxu0 %v53
  %73 = vmatprep.subr.mxu0 0.0
  %74 = vmatpush1.msra.mxu0 0.0
  %75 = vmatprep.subr.mxu0 0.0
  %76 = vmatpush1.msra.mxu0 0.0
  %77 = vmatprep.subr.mxu0 0.0
  %78 = vmatpush1.msra.mxu0 0.0
  %79 = vmatprep.subr.mxu0 0.0
  %80 = vmatpush1.msra.mxu0 0.0
  %81 = vmatprep.subr.mxu0 0.0
  %82 = vmatpush1.msra.mxu0 0.0
  %83 = vmatprep.subr.mxu0 0.0
  %84 = vmatpush1.msra.mxu0 0.0
  %85 = vmatprep.subr.mxu0 0.0
  %86 = vmatpush1.msra.mxu0 0.0
  %87 = vmatprep.subr.mxu0 0.0
  %88 = vmatpush1.msra.mxu0 0.0
  %89 = vmatprep.subr.mxu0 0.0
  %90 = vmatpush1.msra.mxu0 0.0
  %91 = vmatprep.subr.mxu0 0.0
  %92 = vmatpush1.msra.mxu0 0.0
  %93 = vmatprep.subr.mxu0 0.0
  %94 = vmatpush1.msra.mxu0 0.0
  %95 = vmatprep.subr.mxu0 0.0
  %96 = vmatpush1.msra.mxu0 0.0
  %97 = vmatprep.subr.mxu0 0.0
  %98 = vmatpush1.msra.mxu0 0.0
  %99 = vmatprep.subr.mxu0 0.0
  %100 = vmatpush1.msra.mxu0 0.0
  %101 = vmatprep.subr.mxu0 0.0
  %102 = vmatpush1.msra.mxu0 0.0
  %103 = vmatprep.subr.mxu0 0.0
  %104 = vmatpush1.msra.mxu0 0.0
  %105 = vmatprep.subr.mxu0 0.0
  %106 = vmatpush1.msra.mxu0 0.0
  %107 = vmatprep.subr.mxu0 0.0
  %108 = vmatpush1.msra.mxu0 0.0
  %109 = vmatprep.subr.mxu0 0.0
  %110 = vmatpush1.msra.mxu0 0.0
  %111 = vmatprep.subr.mxu0 0.0
  %112 = vmatpush1.msra.mxu0 0.0
  %113 = vmatprep.subr.mxu0 0.0
  %114 = vmatpush1.msra.mxu0 0.0
  %115 = vmatprep.subr.mxu0 0.0
  %116 = vmatpush1.msra.mxu0 0.0
  %117 = vmatprep.subr.mxu0 0.0
  %118 = vmatpush1.msra.mxu0 0.0
  %119 = vmatprep.subr.mxu0 0.0
  %120 = vmatpush1.msra.mxu0 0.0
  %121 = vmatprep.subr.mxu0 0.0
  %122 = vmatpush1.msra.mxu0 0.0
  %123 = vmatprep.subr.mxu0 0.0
  %124 = vmatpush1.msra.mxu0 0.0
  %125 = vmatprep.subr.mxu0 0.0
  %126 = vmatpush1.msra.mxu0 0.0
  %127 = vmatprep.subr.mxu0 0.0
  %128 = vmatpush1.msra.mxu0 0.0
  %129 = vmatprep.subr.mxu0 0.0
  %130 = vmatpush1.msra.mxu0 0.0
  %131 = vmatprep.subr.mxu0 0.0
  %132 = vmatpush1.msra.mxu0 0.0
  %133 = vmatprep.subr.mxu0 0.0
  %134 = vmatpush1.msra.mxu0 0.0
  %135 = vmatprep.mubr.f32.mxu0 0.0
  %136 = vmatmul.mubr.f32.gmra.mrb[0].mxu0 %v66
  %v137 = vpop.f32.mrb[0].mxu0
  %v138 = vadd.f32 %v62, %v137
  %v139 = vpop.f32.mrb[0].mxu0
  %140 = vmatprep.mubr.f32.mxu0 0.0
  %141 = vmatmul.mubr.f32.gmra.mrb[0].mxu0 %v69
  %v142 = vpop.f32.mrb[0].mxu0
  %v143 = vadd.f32 %v62, %v142
  %v144 = vpop.f32.mrb[0].mxu0
  %145 = vdwg.mxu0
  %v147 = vlaneseq
  %v148 = vshrl.u32 %v147, 7
  %v149 = vsub.s32 0, %v148
  %v150 = vrot.slane %v56, %v149
  %152 = vmatprep.subr.mxu0 0.0
  %153 = vmatpush1.msra.mxu0 %v54
  %154 = vmatprep.subr.mxu0 0.0
  %155 = vmatpush1.msra.mxu0 0.0
  %156 = vmatprep.subr.mxu0 0.0
  %157 = vmatpush1.msra.mxu0 0.0
  %158 = vmatprep.subr.mxu0 0.0
  %159 = vmatpush1.msra.mxu0 0.0
  %160 = vmatprep.subr.mxu0 0.0
  %161 = vmatpush1.msra.mxu0 0.0
  %162 = vmatprep.subr.mxu0 0.0
  %163 = vmatpush1.msra.mxu0 0.0
  %164 = vmatprep.subr.mxu0 0.0
  %165 = vmatpush1.msra.mxu0 0.0
  %166 = vmatprep.subr.mxu0 0.0
  %167 = vmatpush1.msra.mxu0 0.0
  %168 = vmatprep.subr.mxu0 0.0
  %169 = vmatpush1.msra.mxu0 0.0
  %170 = vmatprep.subr.mxu0 0.0
  %171 = vmatpush1.msra.mxu0 0.0
  %172 = vmatprep.subr.mxu0 0.0
  %173 = vmatpush1.msra.mxu0 0.0
  %174 = vmatprep.subr.mxu0 0.0
  %175 = vmatpush1.msra.mxu0 0.0
  %176 = vmatprep.subr.mxu0 0.0
  %177 = vmatpush1.msra.mxu0 0.0
  %178 = vmatprep.subr.mxu0 0.0
  %179 = vmatpush1.msra.mxu0 0.0
  %180 = vmatprep.subr.mxu0 0.0
  %181 = vmatpush1.msra.mxu0 0.0
  %182 = vmatprep.subr.mxu0 0.0
  %183 = vmatpush1.msra.mxu0 0.0
  %184 = vmatprep.subr.mxu0 0.0
  %185 = vmatpush1.msra.mxu0 0.0
  %186 = vmatprep.subr.mxu0 0.0
  %187 = vmatpush1.msra.mxu0 0.0
  %188 = vmatprep.subr.mxu0 0.0
  %189 = vmatpush1.msra.mxu0 0.0
  %190 = vmatprep.subr.mxu0 0.0
  %191 = vmatpush1.msra.mxu0 0.0
  %192 = vmatprep.subr.mxu0 0.0
  %193 = vmatpush1.msra.mxu0 0.0
  %194 = vmatprep.subr.mxu0 0.0
  %195 = vmatpush1.msra.mxu0 0.0
  %196 = vmatprep.subr.mxu0 0.0
  %197 = vmatpush1.msra.mxu0 0.0
  %198 = vmatprep.subr.mxu0 0.0
  %199 = vmatpush1.msra.mxu0 0.0
  %200 = vmatprep.subr.mxu0 0.0
  %201 = vmatpush1.msra.mxu0 0.0
  %202 = vmatprep.subr.mxu0 0.0
  %203 = vmatpush1.msra.mxu0 0.0
  %204 = vmatprep.subr.mxu0 0.0
  %205 = vmatpush1.msra.mxu0 0.0
  %206 = vmatprep.subr.mxu0 0.0
  %207 = vmatpush1.msra.mxu0 0.0
  %208 = vmatprep.subr.mxu0 0.0
  %209 = vmatpush1.msra.mxu0 0.0
  %210 = vmatprep.subr.mxu0 0.0
  %211 = vmatpush1.msra.mxu0 0.0
  %212 = vmatprep.subr.mxu0 0.0
  %213 = vmatpush1.msra.mxu0 0.0
  %214 = vmatprep.subr.mxu0 0.0
  %215 = vmatpush1.msra.mxu0 0.0
  %216 = vmatprep.mubr.f32.mxu0 0.0
  %217 = vmatmul.mubr.f32.gmra.mrb[0].mxu0 %v66
  %v218 = vpop.f32.mrb[0].mxu0
  %v219 = vadd.f32 %v150, %v218
  %v220 = vpop.f32.mrb[0].mxu0
  %221 = vmatprep.mubr.f32.mxu0 0.0
  %222 = vmatmul.mubr.f32.gmra.mrb[0].mxu0 %v69
  %v223 = vpop.f32.mrb[0].mxu0
  %v224 = vadd.f32 %v150, %v223
  %v225 = vpop.f32.mrb[0].mxu0
  %226 = vdwg.mxu0
  %227 = vxpose.xlu0.b32.start [1/16] %v138, 128
  %228 = vxpose.xlu0.b32.cont [2/16] %v143, 128
  %229 = vxpose.xlu0.b32.cont [3/16] 0.0, 128
  %230 = vxpose.xlu0.b32.cont [4/16] 0.0, 128
  %231 = vxpose.xlu0.b32.cont [5/16] 0.0, 128
  %232 = vxpose.xlu0.b32.cont [6/16] 0.0, 128
  %233 = vxpose.xlu0.b32.cont [7/16] 0.0, 128
  %234 = vxpose.xlu0.b32.cont [8/16] 0.0, 128
  %235 = vxpose.xlu0.b32.cont [9/16] 0.0, 128
  %236 = vxpose.xlu0.b32.cont [10/16] 0.0, 128
  %237 = vxpose.xlu0.b32.cont [11/16] 0.0, 128
  %238 = vxpose.xlu0.b32.cont [12/16] 0.0, 128
  %239 = vxpose.xlu0.b32.cont [13/16] 0.0, 128
  %240 = vxpose.xlu0.b32.cont [14/16] 0.0, 128
  %241 = vxpose.xlu0.b32.cont [15/16] 0.0, 128
  %242 = vxpose.xlu0.b32.end [16/16] 0.0, 128
  %v243 = vpop.trf.xlu0
  %v244 = vpop.trf.xlu0
  %v245 = vpop.trf.xlu0
  %v246 = vpop.trf.xlu0
  %v247 = vpop.trf.xlu0
  %v248 = vpop.trf.xlu0
  %v249 = vpop.trf.xlu0
  %v250 = vpop.trf.xlu0
  %v251 = vpop.trf.xlu0
  %v252 = vpop.trf.xlu0
  %v253 = vpop.trf.xlu0
  %v254 = vpop.trf.xlu0
  %v255 = vpop.trf.xlu0
  %v256 = vpop.trf.xlu0
  %v257 = vpop.trf.xlu0
  %v258 = vpop.trf.xlu0
  %260 = vset.pattern.permute.xlu0 0
  %261 = vperm.xlu0 %260, %v219
  %v262 = vpop.permute.xlu0 %261
  %265 = vset.pattern.permute.xlu0 0
  %266 = vperm.xlu0 %265, %v224
  %v267 = vpop.permute.xlu0 %266
  %v269 = vlaneseq
  %v270 = vshrl.u32 %v269, 7
  %v271 = vsub.s32 0, %v270
  %v272 = vrot.slane %v243, %v271
  %v273 = vadd.f32 %v262, %v272
  %v274 = vadd.f32 %v267, %v272
  %v275 = vmul.f32 %v273, 0.2
  %v276 = vmul.f32 %v274, 0.2
  %v277 = vmax.f32 %v273, %v275
  %v278 = vmax.f32 %v274, %v276
  %v280 = vlaneseq
  %v281 = vshrl.u32 %v280, 7
  %v282 = vsub.s32 0, %v281
  %v283 = vrot.slane %v57, %v282
  %284 = vset.pattern.permute.xlu0 0
  %285 = vperm.xlu0 %284, %v283
  %v286 = vpop.permute.xlu0 %285
  %v288 = vmul.f32 %v286, %v277
  %v289 = vmul.f32 %v286, %v278
  %v290 = vadd.f32 %v288, 0.0
  %v291 = vadd.f32 %v289, 0.0
  %292 = vset.pattern.permute.xlu0 1
  %293 = vperm.xlu0 %292, %v219
  %v294 = vpop.permute.xlu0 %293
  %296 = vset.pattern.permute.xlu0 1
  %297 = vperm.xlu0 %296, %v224
  %v298 = vpop.permute.xlu0 %297
  %v300 = vlaneseq
  %v301 = vshrl.u32 %v300, 7
  %v302 = vsub.s32 1, %v301
  %v303 = vrot.slane %v243, %v302
  %v304 = vadd.f32 %v294, %v303
  %v305 = vadd.f32 %v298, %v303
  %v306 = vmul.f32 %v304, 0.2
  %v307 = vmul.f32 %v305, 0.2
  %v308 = vmax.f32 %v304, %v306
  %v309 = vmax.f32 %v305, %v307
  %310 = vset.pattern.permute.xlu0 1
  %311 = vperm.xlu0 %310, %v283
  %v312 = vpop.permute.xlu0 %311
  %v314 = vmul.f32 %v312, %v308
  %v315 = vmul.f32 %v312, %v309
  %v316 = vadd.f32 %v290, %v314
  %v317 = vadd.f32 %v291, %v315
  %318 = vset.pattern.permute.xlu0 2
  %319 = vperm.xlu0 %318, %v219
  %v320 = vpop.permute.xlu0 %319
  %322 = vset.pattern.permute.xlu0 2
  %323 = vperm.xlu0 %322, %v224
  %v324 = vpop.permute.xlu0 %323
  %v326 = vlaneseq
  %v327 = vshrl.u32 %v326, 7
  %v328 = vsub.s32 2, %v327
  %v329 = vrot.slane %v243, %v328
  %v330 = vadd.f32 %v320, %v329
  %v331 = vadd.f32 %v324, %v329
  %v332 = vmul.f32 %v330, 0.2
  %v333 = vmul.f32 %v331, 0.2
  %v334 = vmax.f32 %v330, %v332
  %v335 = vmax.f32 %v331, %v333
  %336 = vset.pattern.permute.xlu0 2
  %337 = vperm.xlu0 %336, %v283
  %v338 = vpop.permute.xlu0 %337
  %v340 = vmul.f32 %v338, %v334
  %v341 = vmul.f32 %v338, %v335
  %v342 = vadd.f32 %v316, %v340
  %v343 = vadd.f32 %v317, %v341
  %344 = vset.pattern.permute.xlu0 3
  %345 = vperm.xlu0 %344, %v219
  %v346 = vpop.permute.xlu0 %345
  %348 = vset.pattern.permute.xlu0 3
  %349 = vperm.xlu0 %348, %v224
  %v350 = vpop.permute.xlu0 %349
  %v352 = vlaneseq
  %v353 = vshrl.u32 %v352, 7
  %v354 = vsub.s32 3, %v353
  %v355 = vrot.slane %v243, %v354
  %v356 = vadd.f32 %v346, %v355
  %v357 = vadd.f32 %v350, %v355
  %v358 = vmul.f32 %v356, 0.2
  %v359 = vmul.f32 %v357, 0.2
  %v360 = vmax.f32 %v356, %v358
  %v361 = vmax.f32 %v357, %v359
  %362 = vset.pattern.permute.xlu0 3
  %363 = vperm.xlu0 %362, %v283
  %v364 = vpop.permute.xlu0 %363
  %v366 = vmul.f32 %v364, %v360
  %v367 = vmul.f32 %v364, %v361
  %v368 = vadd.f32 %v342, %v366
  %v369 = vadd.f32 %v343, %v367
  %370 = vset.pattern.permute.xlu0 4
  %371 = vperm.xlu0 %370, %v219
  %v372 = vpop.permute.xlu0 %371
  %374 = vset.pattern.permute.xlu0 4
  %375 = vperm.xlu0 %374, %v224
  %v376 = vpop.permute.xlu0 %375
  %v378 = vlaneseq
  %v379 = vshrl.u32 %v378, 7
  %v380 = vsub.s32 4, %v379
  %v381 = vrot.slane %v243, %v380
  %v382 = vadd.f32 %v372, %v381
  %v383 = vadd.f32 %v376, %v381
  %v384 = vmul.f32 %v382, 0.2
  %v385 = vmul.f32 %v383, 0.2
  %v386 = vmax.f32 %v382, %v384
  %v387 = vmax.f32 %v383, %v385
  %388 = vset.pattern.permute.xlu0 4
  %389 = vperm.xlu0 %388, %v283
  %v390 = vpop.permute.xlu0 %389
  %v392 = vmul.f32 %v390, %v386
  %v393 = vmul.f32 %v390, %v387
  %v394 = vadd.f32 %v368, %v392
  %v395 = vadd.f32 %v369, %v393
  %396 = vset.pattern.permute.xlu0 5
  %397 = vperm.xlu0 %396, %v219
  %v398 = vpop.permute.xlu0 %397
  %400 = vset.pattern.permute.xlu0 5
  %401 = vperm.xlu0 %400, %v224
  %v402 = vpop.permute.xlu0 %401
  %v404 = vlaneseq
  %v405 = vshrl.u32 %v404, 7
  %v406 = vsub.s32 5, %v405
  %v407 = vrot.slane %v243, %v406
  %v408 = vadd.f32 %v398, %v407
  %v409 = vadd.f32 %v402, %v407
  %v410 = vmul.f32 %v408, 0.2
  %v411 = vmul.f32 %v409, 0.2
  %v412 = vmax.f32 %v408, %v410
  %v413 = vmax.f32 %v409, %v411
  %414 = vset.pattern.permute.xlu0 5
  %415 = vperm.xlu0 %414, %v283
  %v416 = vpop.permute.xlu0 %415
  %v418 = vmul.f32 %v416, %v412
  %v419 = vmul.f32 %v416, %v413
  %v420 = vadd.f32 %v394, %v418
  %v421 = vadd.f32 %v395, %v419
  %422 = vset.pattern.permute.xlu0 6
  %423 = vperm.xlu0 %422, %v219
  %v424 = vpop.permute.xlu0 %423
  %426 = vset.pattern.permute.xlu0 6
  %427 = vperm.xlu0 %426, %v224
  %v428 = vpop.permute.xlu0 %427
  %v430 = vlaneseq
  %v431 = vshrl.u32 %v430, 7
  %v432 = vsub.s32 6, %v431
  %v433 = vrot.slane %v243, %v432
  %v434 = vadd.f32 %v424, %v433
  %v435 = vadd.f32 %v428, %v433
  %v436 = vmul.f32 %v434, 0.2
  %v437 = vmul.f32 %v435, 0.2
  %v438 = vmax.f32 %v434, %v436
  %v439 = vmax.f32 %v435, %v437
  %440 = vset.pattern.permute.xlu0 6
  %441 = vperm.xlu0 %440, %v283
  %v442 = vpop.permute.xlu0 %441
  %v444 = vmul.f32 %v442, %v438
  %v445 = vmul.f32 %v442, %v439
  %v446 = vadd.f32 %v420, %v444
  %v447 = vadd.f32 %v421, %v445
  %448 = vset.pattern.permute.xlu0 7
  %449 = vperm.xlu0 %448, %v219
  %v450 = vpop.permute.xlu0 %449
  %452 = vset.pattern.permute.xlu0 7
  %453 = vperm.xlu0 %452, %v224
  %v454 = vpop.permute.xlu0 %453
  %v456 = vlaneseq
  %v457 = vshrl.u32 %v456, 7
  %v458 = vsub.s32 7, %v457
  %v459 = vrot.slane %v243, %v458
  %v460 = vadd.f32 %v450, %v459
  %v461 = vadd.f32 %v454, %v459
  %v462 = vmul.f32 %v460, 0.2
  %v463 = vmul.f32 %v461, 0.2
  %v464 = vmax.f32 %v460, %v462
  %v465 = vmax.f32 %v461, %v463
  %466 = vset.pattern.permute.xlu0 7
  %467 = vperm.xlu0 %466, %v283
  %v468 = vpop.permute.xlu0 %467
  %v470 = vmul.f32 %v468, %v464
  %v471 = vmul.f32 %v468, %v465
  %v472 = vadd.f32 %v446, %v470
  %v473 = vadd.f32 %v447, %v471
  %v474 = vsel %vm51, %v472, -1e+30
  %v475 = vsel %vm52, %v473, -1e+30
  %vm476 = vcmask 130048
  %v477 = vsel %vm476, %v474, -inf
  %478 = vmax.xlane.f32.xlu0 %v477
  %v479 = vpop.xlane.xlu0 %478
  %v480 = vsel %vm476, %v475, -inf
  %481 = vmax.xlane.f32.xlu0 %v480
  %v482 = vpop.xlane.xlu0 %481
  %v483 = vsub.f32 %v474, %v479
  %v484 = vsub.f32 %v475, %v482
  %v485 = vmul.f32 %v483, 1.442695
  %v486 = vpow.pop %v485
  %v487 = vmul.f32 %v484, 1.442695
  %v488 = vpow.pop %v487
  %v489 = vsel %vm51, %v486, 0.0
  %v490 = vsel %vm52, %v488, 0.0
  %v491 = vsel %vm476, %v489, 0.0
  %492 = vadd.xlane.f32.xlu0 %v491
  %v493 = vpop.xlane.xlu0 %492
  %v494 = vsel %vm476, %v490, 0.0
  %495 = vadd.xlane.f32.xlu0 %v494
  %v496 = vpop.xlane.xlu0 %495
  %v497 = vrcp.pop %v493
  %v498 = vmul.f32 %v489, %v497
  %v499 = vrcp.pop %v496
  %v500 = vmul.f32 %v490, %v499
  %501 = vset.pattern.permute.xlu0 8
  %502 = vperm.xlu0 %501, %v219
  %v503 = vpop.permute.xlu0 %502
  %505 = vset.pattern.permute.xlu0 8
  %506 = vperm.xlu0 %505, %v224
  %v507 = vpop.permute.xlu0 %506
  %v509 = vlaneseq
  %v510 = vshrl.u32 %v509, 7
  %v511 = vsub.s32 0, %v510
  %v512 = vrot.slane %v244, %v511
  %v513 = vadd.f32 %v503, %v512
  %v514 = vadd.f32 %v507, %v512
  %v515 = vmul.f32 %v513, 0.2
  %v516 = vmul.f32 %v514, 0.2
  %v517 = vmax.f32 %v513, %v515
  %v518 = vmax.f32 %v514, %v516
  %519 = vset.pattern.permute.xlu0 8
  %520 = vperm.xlu0 %519, %v283
  %v521 = vpop.permute.xlu0 %520
  %v523 = vmul.f32 %v521, %v517
  %v524 = vmul.f32 %v521, %v518
  %v525 = vadd.f32 %v523, 0.0
  %v526 = vadd.f32 %v524, 0.0
  %527 = vset.pattern.permute.xlu0 9
  %528 = vperm.xlu0 %527, %v219
  %v529 = vpop.permute.xlu0 %528
  %531 = vset.pattern.permute.xlu0 9
  %532 = vperm.xlu0 %531, %v224
  %v533 = vpop.permute.xlu0 %532
  %v535 = vlaneseq
  %v536 = vshrl.u32 %v535, 7
  %v537 = vsub.s32 1, %v536
  %v538 = vrot.slane %v244, %v537
  %v539 = vadd.f32 %v529, %v538
  %v540 = vadd.f32 %v533, %v538
  %v541 = vmul.f32 %v539, 0.2
  %v542 = vmul.f32 %v540, 0.2
  %v543 = vmax.f32 %v539, %v541
  %v544 = vmax.f32 %v540, %v542
  %545 = vset.pattern.permute.xlu0 9
  %546 = vperm.xlu0 %545, %v283
  %v547 = vpop.permute.xlu0 %546
  %v549 = vmul.f32 %v547, %v543
  %v550 = vmul.f32 %v547, %v544
  %v551 = vadd.f32 %v525, %v549
  %v552 = vadd.f32 %v526, %v550
  %553 = vset.pattern.permute.xlu0 10
  %554 = vperm.xlu0 %553, %v219
  %v555 = vpop.permute.xlu0 %554
  %557 = vset.pattern.permute.xlu0 10
  %558 = vperm.xlu0 %557, %v224
  %v559 = vpop.permute.xlu0 %558
  %v561 = vlaneseq
  %v562 = vshrl.u32 %v561, 7
  %v563 = vsub.s32 2, %v562
  %v564 = vrot.slane %v244, %v563
  %v565 = vadd.f32 %v555, %v564
  %v566 = vadd.f32 %v559, %v564
  %v567 = vmul.f32 %v565, 0.2
  %v568 = vmul.f32 %v566, 0.2
  %v569 = vmax.f32 %v565, %v567
  %v570 = vmax.f32 %v566, %v568
  %571 = vset.pattern.permute.xlu0 10
  %572 = vperm.xlu0 %571, %v283
  %v573 = vpop.permute.xlu0 %572
  %v575 = vmul.f32 %v573, %v569
  %v576 = vmul.f32 %v573, %v570
  %v577 = vadd.f32 %v551, %v575
  %v578 = vadd.f32 %v552, %v576
  %579 = vset.pattern.permute.xlu0 11
  %580 = vperm.xlu0 %579, %v219
  %v581 = vpop.permute.xlu0 %580
  %583 = vset.pattern.permute.xlu0 11
  %584 = vperm.xlu0 %583, %v224
  %v585 = vpop.permute.xlu0 %584
  %v587 = vlaneseq
  %v588 = vshrl.u32 %v587, 7
  %v589 = vsub.s32 3, %v588
  %v590 = vrot.slane %v244, %v589
  %v591 = vadd.f32 %v581, %v590
  %v592 = vadd.f32 %v585, %v590
  %v593 = vmul.f32 %v591, 0.2
  %v594 = vmul.f32 %v592, 0.2
  %v595 = vmax.f32 %v591, %v593
  %v596 = vmax.f32 %v592, %v594
  %597 = vset.pattern.permute.xlu0 11
  %598 = vperm.xlu0 %597, %v283
  %v599 = vpop.permute.xlu0 %598
  %v601 = vmul.f32 %v599, %v595
  %v602 = vmul.f32 %v599, %v596
  %v603 = vadd.f32 %v577, %v601
  %v604 = vadd.f32 %v578, %v602
  %605 = vset.pattern.permute.xlu0 12
  %606 = vperm.xlu0 %605, %v219
  %v607 = vpop.permute.xlu0 %606
  %609 = vset.pattern.permute.xlu0 12
  %610 = vperm.xlu0 %609, %v224
  %v611 = vpop.permute.xlu0 %610
  %v613 = vlaneseq
  %v614 = vshrl.u32 %v613, 7
  %v615 = vsub.s32 4, %v614
  %v616 = vrot.slane %v244, %v615
  %v617 = vadd.f32 %v607, %v616
  %v618 = vadd.f32 %v611, %v616
  %v619 = vmul.f32 %v617, 0.2
  %v620 = vmul.f32 %v618, 0.2
  %v621 = vmax.f32 %v617, %v619
  %v622 = vmax.f32 %v618, %v620
  %623 = vset.pattern.permute.xlu0 12
  %624 = vperm.xlu0 %623, %v283
  %v625 = vpop.permute.xlu0 %624
  %v627 = vmul.f32 %v625, %v621
  %v628 = vmul.f32 %v625, %v622
  %v629 = vadd.f32 %v603, %v627
  %v630 = vadd.f32 %v604, %v628
  %631 = vset.pattern.permute.xlu0 13
  %632 = vperm.xlu0 %631, %v219
  %v633 = vpop.permute.xlu0 %632
  %635 = vset.pattern.permute.xlu0 13
  %636 = vperm.xlu0 %635, %v224
  %v637 = vpop.permute.xlu0 %636
  %v639 = vlaneseq
  %v640 = vshrl.u32 %v639, 7
  %v641 = vsub.s32 5, %v640
  %v642 = vrot.slane %v244, %v641
  %v643 = vadd.f32 %v633, %v642
  %v644 = vadd.f32 %v637, %v642
  %v645 = vmul.f32 %v643, 0.2
  %v646 = vmul.f32 %v644, 0.2
  %v647 = vmax.f32 %v643, %v645
  %v648 = vmax.f32 %v644, %v646
  %649 = vset.pattern.permute.xlu0 13
  %650 = vperm.xlu0 %649, %v283
  %v651 = vpop.permute.xlu0 %650
  %v653 = vmul.f32 %v651, %v647
  %v654 = vmul.f32 %v651, %v648
  %v655 = vadd.f32 %v629, %v653
  %v656 = vadd.f32 %v630, %v654
  %657 = vset.pattern.permute.xlu0 14
  %658 = vperm.xlu0 %657, %v219
  %v659 = vpop.permute.xlu0 %658
  %661 = vset.pattern.permute.xlu0 14
  %662 = vperm.xlu0 %661, %v224
  %v663 = vpop.permute.xlu0 %662
  %v665 = vlaneseq
  %v666 = vshrl.u32 %v665, 7
  %v667 = vsub.s32 6, %v666
  %v668 = vrot.slane %v244, %v667
  %v669 = vadd.f32 %v659, %v668
  %v670 = vadd.f32 %v663, %v668
  %v671 = vmul.f32 %v669, 0.2
  %v672 = vmul.f32 %v670, 0.2
  %v673 = vmax.f32 %v669, %v671
  %v674 = vmax.f32 %v670, %v672
  %675 = vset.pattern.permute.xlu0 14
  %676 = vperm.xlu0 %675, %v283
  %v677 = vpop.permute.xlu0 %676
  %v679 = vmul.f32 %v677, %v673
  %v680 = vmul.f32 %v677, %v674
  %v681 = vadd.f32 %v655, %v679
  %v682 = vadd.f32 %v656, %v680
  %683 = vset.pattern.permute.xlu0 15
  %684 = vperm.xlu0 %683, %v219
  %v685 = vpop.permute.xlu0 %684
  %687 = vset.pattern.permute.xlu0 15
  %688 = vperm.xlu0 %687, %v224
  %v689 = vpop.permute.xlu0 %688
  %v691 = vlaneseq
  %v692 = vshrl.u32 %v691, 7
  %v693 = vsub.s32 7, %v692
  %v694 = vrot.slane %v244, %v693
  %v695 = vadd.f32 %v685, %v694
  %v696 = vadd.f32 %v689, %v694
  %v697 = vmul.f32 %v695, 0.2
  %v698 = vmul.f32 %v696, 0.2
  %v699 = vmax.f32 %v695, %v697
  %v700 = vmax.f32 %v696, %v698
  %701 = vset.pattern.permute.xlu0 15
  %702 = vperm.xlu0 %701, %v283
  %v703 = vpop.permute.xlu0 %702
  %v705 = vmul.f32 %v703, %v699
  %v706 = vmul.f32 %v703, %v700
  %v707 = vadd.f32 %v681, %v705
  %v708 = vadd.f32 %v682, %v706
  %v709 = vsel %vm51, %v707, -1e+30
  %v710 = vsel %vm52, %v708, -1e+30
  %v711 = vsel %vm476, %v709, -inf
  %712 = vmax.xlane.f32.xlu0 %v711
  %v713 = vpop.xlane.xlu0 %712
  %v714 = vsel %vm476, %v710, -inf
  %715 = vmax.xlane.f32.xlu0 %v714
  %v716 = vpop.xlane.xlu0 %715
  %v717 = vsub.f32 %v709, %v713
  %v718 = vsub.f32 %v710, %v716
  %v719 = vmul.f32 %v717, 1.442695
  %v720 = vpow.pop %v719
  %v721 = vmul.f32 %v718, 1.442695
  %v722 = vpow.pop %v721
  %v723 = vsel %vm51, %v720, 0.0
  %v724 = vsel %vm52, %v722, 0.0
  %v725 = vsel %vm476, %v723, 0.0
  %726 = vadd.xlane.f32.xlu0 %v725
  %v727 = vpop.xlane.xlu0 %726
  %v728 = vsel %vm476, %v724, 0.0
  %729 = vadd.xlane.f32.xlu0 %v728
  %v730 = vpop.xlane.xlu0 %729
  %v731 = vrcp.pop %v727
  %v732 = vmul.f32 %v723, %v731
  %v733 = vrcp.pop %v730
  %v734 = vmul.f32 %v724, %v733
  %735 = vset.pattern.permute.xlu0 16
  %736 = vperm.xlu0 %735, %v219
  %v737 = vpop.permute.xlu0 %736
  %739 = vset.pattern.permute.xlu0 16
  %740 = vperm.xlu0 %739, %v224
  %v741 = vpop.permute.xlu0 %740
  %v743 = vlaneseq
  %v744 = vshrl.u32 %v743, 7
  %v745 = vsub.s32 0, %v744
  %v746 = vrot.slane %v245, %v745
  %v747 = vadd.f32 %v737, %v746
  %v748 = vadd.f32 %v741, %v746
  %v749 = vmul.f32 %v747, 0.2
  %v750 = vmul.f32 %v748, 0.2
  %v751 = vmax.f32 %v747, %v749
  %v752 = vmax.f32 %v748, %v750
  %753 = vset.pattern.permute.xlu0 16
  %754 = vperm.xlu0 %753, %v283
  %v755 = vpop.permute.xlu0 %754
  %v757 = vmul.f32 %v755, %v751
  %v758 = vmul.f32 %v755, %v752
  %v759 = vadd.f32 %v757, 0.0
  %v760 = vadd.f32 %v758, 0.0
  %761 = vset.pattern.permute.xlu0 17
  %762 = vperm.xlu0 %761, %v219
  %v763 = vpop.permute.xlu0 %762
  %765 = vset.pattern.permute.xlu0 17
  %766 = vperm.xlu0 %765, %v224
  %v767 = vpop.permute.xlu0 %766
  %v769 = vlaneseq
  %v770 = vshrl.u32 %v769, 7
  %v771 = vsub.s32 1, %v770
  %v772 = vrot.slane %v245, %v771
  %v773 = vadd.f32 %v763, %v772
  %v774 = vadd.f32 %v767, %v772
  %v775 = vmul.f32 %v773, 0.2
  %v776 = vmul.f32 %v774, 0.2
  %v777 = vmax.f32 %v773, %v775
  %v778 = vmax.f32 %v774, %v776
  %779 = vset.pattern.permute.xlu0 17
  %780 = vperm.xlu0 %779, %v283
  %v781 = vpop.permute.xlu0 %780
  %v783 = vmul.f32 %v781, %v777
  %v784 = vmul.f32 %v781, %v778
  %v785 = vadd.f32 %v759, %v783
  %v786 = vadd.f32 %v760, %v784
  %787 = vset.pattern.permute.xlu0 18
  %788 = vperm.xlu0 %787, %v219
  %v789 = vpop.permute.xlu0 %788
  %791 = vset.pattern.permute.xlu0 18
  %792 = vperm.xlu0 %791, %v224
  %v793 = vpop.permute.xlu0 %792
  %v795 = vlaneseq
  %v796 = vshrl.u32 %v795, 7
  %v797 = vsub.s32 2, %v796
  %v798 = vrot.slane %v245, %v797
  %v799 = vadd.f32 %v789, %v798
  %v800 = vadd.f32 %v793, %v798
  %v801 = vmul.f32 %v799, 0.2
  %v802 = vmul.f32 %v800, 0.2
  %v803 = vmax.f32 %v799, %v801
  %v804 = vmax.f32 %v800, %v802
  %805 = vset.pattern.permute.xlu0 18
  %806 = vperm.xlu0 %805, %v283
  %v807 = vpop.permute.xlu0 %806
  %v809 = vmul.f32 %v807, %v803
  %v810 = vmul.f32 %v807, %v804
  %v811 = vadd.f32 %v785, %v809
  %v812 = vadd.f32 %v786, %v810
  %813 = vset.pattern.permute.xlu0 19
  %814 = vperm.xlu0 %813, %v219
  %v815 = vpop.permute.xlu0 %814
  %817 = vset.pattern.permute.xlu0 19
  %818 = vperm.xlu0 %817, %v224
  %v819 = vpop.permute.xlu0 %818
  %v821 = vlaneseq
  %v822 = vshrl.u32 %v821, 7
  %v823 = vsub.s32 3, %v822
  %v824 = vrot.slane %v245, %v823
  %v825 = vadd.f32 %v815, %v824
  %v826 = vadd.f32 %v819, %v824
  %v827 = vmul.f32 %v825, 0.2
  %v828 = vmul.f32 %v826, 0.2
  %v829 = vmax.f32 %v825, %v827
  %v830 = vmax.f32 %v826, %v828
  %831 = vset.pattern.permute.xlu0 19
  %832 = vperm.xlu0 %831, %v283
  %v833 = vpop.permute.xlu0 %832
  %v835 = vmul.f32 %v833, %v829
  %v836 = vmul.f32 %v833, %v830
  %v837 = vadd.f32 %v811, %v835
  %v838 = vadd.f32 %v812, %v836
  %839 = vset.pattern.permute.xlu0 20
  %840 = vperm.xlu0 %839, %v219
  %v841 = vpop.permute.xlu0 %840
  %843 = vset.pattern.permute.xlu0 20
  %844 = vperm.xlu0 %843, %v224
  %v845 = vpop.permute.xlu0 %844
  %v847 = vlaneseq
  %v848 = vshrl.u32 %v847, 7
  %v849 = vsub.s32 4, %v848
  %v850 = vrot.slane %v245, %v849
  %v851 = vadd.f32 %v841, %v850
  %v852 = vadd.f32 %v845, %v850
  %v853 = vmul.f32 %v851, 0.2
  %v854 = vmul.f32 %v852, 0.2
  %v855 = vmax.f32 %v851, %v853
  %v856 = vmax.f32 %v852, %v854
  %857 = vset.pattern.permute.xlu0 20
  %858 = vperm.xlu0 %857, %v283
  %v859 = vpop.permute.xlu0 %858
  %v861 = vmul.f32 %v859, %v855
  %v862 = vmul.f32 %v859, %v856
  %v863 = vadd.f32 %v837, %v861
  %v864 = vadd.f32 %v838, %v862
  %865 = vset.pattern.permute.xlu0 21
  %866 = vperm.xlu0 %865, %v219
  %v867 = vpop.permute.xlu0 %866
  %869 = vset.pattern.permute.xlu0 21
  %870 = vperm.xlu0 %869, %v224
  %v871 = vpop.permute.xlu0 %870
  %v873 = vlaneseq
  %v874 = vshrl.u32 %v873, 7
  %v875 = vsub.s32 5, %v874
  %v876 = vrot.slane %v245, %v875
  %v877 = vadd.f32 %v867, %v876
  %v878 = vadd.f32 %v871, %v876
  %v879 = vmul.f32 %v877, 0.2
  %v880 = vmul.f32 %v878, 0.2
  %v881 = vmax.f32 %v877, %v879
  %v882 = vmax.f32 %v878, %v880
  %883 = vset.pattern.permute.xlu0 21
  %884 = vperm.xlu0 %883, %v283
  %v885 = vpop.permute.xlu0 %884
  %v887 = vmul.f32 %v885, %v881
  %v888 = vmul.f32 %v885, %v882
  %v889 = vadd.f32 %v863, %v887
  %v890 = vadd.f32 %v864, %v888
  %891 = vset.pattern.permute.xlu0 22
  %892 = vperm.xlu0 %891, %v219
  %v893 = vpop.permute.xlu0 %892
  %895 = vset.pattern.permute.xlu0 22
  %896 = vperm.xlu0 %895, %v224
  %v897 = vpop.permute.xlu0 %896
  %v899 = vlaneseq
  %v900 = vshrl.u32 %v899, 7
  %v901 = vsub.s32 6, %v900
  %v902 = vrot.slane %v245, %v901
  %v903 = vadd.f32 %v893, %v902
  %v904 = vadd.f32 %v897, %v902
  %v905 = vmul.f32 %v903, 0.2
  %v906 = vmul.f32 %v904, 0.2
  %v907 = vmax.f32 %v903, %v905
  %v908 = vmax.f32 %v904, %v906
  %909 = vset.pattern.permute.xlu0 22
  %910 = vperm.xlu0 %909, %v283
  %v911 = vpop.permute.xlu0 %910
  %v913 = vmul.f32 %v911, %v907
  %v914 = vmul.f32 %v911, %v908
  %v915 = vadd.f32 %v889, %v913
  %v916 = vadd.f32 %v890, %v914
  %917 = vset.pattern.permute.xlu0 23
  %918 = vperm.xlu0 %917, %v219
  %v919 = vpop.permute.xlu0 %918
  %921 = vset.pattern.permute.xlu0 23
  %922 = vperm.xlu0 %921, %v224
  %v923 = vpop.permute.xlu0 %922
  %v925 = vlaneseq
  %v926 = vshrl.u32 %v925, 7
  %v927 = vsub.s32 7, %v926
  %v928 = vrot.slane %v245, %v927
  %v929 = vadd.f32 %v919, %v928
  %v930 = vadd.f32 %v923, %v928
  %v931 = vmul.f32 %v929, 0.2
  %v932 = vmul.f32 %v930, 0.2
  %v933 = vmax.f32 %v929, %v931
  %v934 = vmax.f32 %v930, %v932
  %935 = vset.pattern.permute.xlu0 23
  %936 = vperm.xlu0 %935, %v283
  %v937 = vpop.permute.xlu0 %936
  %v939 = vmul.f32 %v937, %v933
  %v940 = vmul.f32 %v937, %v934
  %v941 = vadd.f32 %v915, %v939
  %v942 = vadd.f32 %v916, %v940
  %v943 = vsel %vm51, %v941, -1e+30
  %v944 = vsel %vm52, %v942, -1e+30
  %v945 = vsel %vm476, %v943, -inf
  %946 = vmax.xlane.f32.xlu0 %v945
  %v947 = vpop.xlane.xlu0 %946
  %v948 = vsel %vm476, %v944, -inf
  %949 = vmax.xlane.f32.xlu0 %v948
  %v950 = vpop.xlane.xlu0 %949
  %v951 = vsub.f32 %v943, %v947
  %v952 = vsub.f32 %v944, %v950
  %v953 = vmul.f32 %v951, 1.442695
  %v954 = vpow.pop %v953
  %v955 = vmul.f32 %v952, 1.442695
  %v956 = vpow.pop %v955
  %v957 = vsel %vm51, %v954, 0.0
  %v958 = vsel %vm52, %v956, 0.0
  %v959 = vsel %vm476, %v957, 0.0
  %960 = vadd.xlane.f32.xlu0 %v959
  %v961 = vpop.xlane.xlu0 %960
  %v962 = vsel %vm476, %v958, 0.0
  %963 = vadd.xlane.f32.xlu0 %v962
  %v964 = vpop.xlane.xlu0 %963
  %v965 = vrcp.pop %v961
  %v966 = vmul.f32 %v957, %v965
  %v967 = vrcp.pop %v964
  %v968 = vmul.f32 %v958, %v967
  %969 = vset.pattern.permute.xlu0 24
  %970 = vperm.xlu0 %969, %v219
  %v971 = vpop.permute.xlu0 %970
  %973 = vset.pattern.permute.xlu0 24
  %974 = vperm.xlu0 %973, %v224
  %v975 = vpop.permute.xlu0 %974
  %v977 = vlaneseq
  %v978 = vshrl.u32 %v977, 7
  %v979 = vsub.s32 0, %v978
  %v980 = vrot.slane %v246, %v979
  %v981 = vadd.f32 %v971, %v980
  %v982 = vadd.f32 %v975, %v980
  %v983 = vmul.f32 %v981, 0.2
  %v984 = vmul.f32 %v982, 0.2
  %v985 = vmax.f32 %v981, %v983
  %v986 = vmax.f32 %v982, %v984
  %987 = vset.pattern.permute.xlu0 24
  %988 = vperm.xlu0 %987, %v283
  %v989 = vpop.permute.xlu0 %988
  %v991 = vmul.f32 %v989, %v985
  %v992 = vmul.f32 %v989, %v986
  %v993 = vadd.f32 %v991, 0.0
  %v994 = vadd.f32 %v992, 0.0
  %995 = vset.pattern.permute.xlu0 25
  %996 = vperm.xlu0 %995, %v219
  %v997 = vpop.permute.xlu0 %996
  %999 = vset.pattern.permute.xlu0 25
  %1000 = vperm.xlu0 %999, %v224
  %v1001 = vpop.permute.xlu0 %1000
  %v1003 = vlaneseq
  %v1004 = vshrl.u32 %v1003, 7
  %v1005 = vsub.s32 1, %v1004
  %v1006 = vrot.slane %v246, %v1005
  %v1007 = vadd.f32 %v997, %v1006
  %v1008 = vadd.f32 %v1001, %v1006
  %v1009 = vmul.f32 %v1007, 0.2
  %v1010 = vmul.f32 %v1008, 0.2
  %v1011 = vmax.f32 %v1007, %v1009
  %v1012 = vmax.f32 %v1008, %v1010
  %1013 = vset.pattern.permute.xlu0 25
  %1014 = vperm.xlu0 %1013, %v283
  %v1015 = vpop.permute.xlu0 %1014
  %v1017 = vmul.f32 %v1015, %v1011
  %v1018 = vmul.f32 %v1015, %v1012
  %v1019 = vadd.f32 %v993, %v1017
  %v1020 = vadd.f32 %v994, %v1018
  %1021 = vset.pattern.permute.xlu0 26
  %1022 = vperm.xlu0 %1021, %v219
  %v1023 = vpop.permute.xlu0 %1022
  %1025 = vset.pattern.permute.xlu0 26
  %1026 = vperm.xlu0 %1025, %v224
  %v1027 = vpop.permute.xlu0 %1026
  %v1029 = vlaneseq
  %v1030 = vshrl.u32 %v1029, 7
  %v1031 = vsub.s32 2, %v1030
  %v1032 = vrot.slane %v246, %v1031
  %v1033 = vadd.f32 %v1023, %v1032
  %v1034 = vadd.f32 %v1027, %v1032
  %v1035 = vmul.f32 %v1033, 0.2
  %v1036 = vmul.f32 %v1034, 0.2
  %v1037 = vmax.f32 %v1033, %v1035
  %v1038 = vmax.f32 %v1034, %v1036
  %1039 = vset.pattern.permute.xlu0 26
  %1040 = vperm.xlu0 %1039, %v283
  %v1041 = vpop.permute.xlu0 %1040
  %v1043 = vmul.f32 %v1041, %v1037
  %v1044 = vmul.f32 %v1041, %v1038
  %v1045 = vadd.f32 %v1019, %v1043
  %v1046 = vadd.f32 %v1020, %v1044
  %1047 = vset.pattern.permute.xlu0 27
  %1048 = vperm.xlu0 %1047, %v219
  %v1049 = vpop.permute.xlu0 %1048
  %1051 = vset.pattern.permute.xlu0 27
  %1052 = vperm.xlu0 %1051, %v224
  %v1053 = vpop.permute.xlu0 %1052
  %v1055 = vlaneseq
  %v1056 = vshrl.u32 %v1055, 7
  %v1057 = vsub.s32 3, %v1056
  %v1058 = vrot.slane %v246, %v1057
  %v1059 = vadd.f32 %v1049, %v1058
  %v1060 = vadd.f32 %v1053, %v1058
  %v1061 = vmul.f32 %v1059, 0.2
  %v1062 = vmul.f32 %v1060, 0.2
  %v1063 = vmax.f32 %v1059, %v1061
  %v1064 = vmax.f32 %v1060, %v1062
  %1065 = vset.pattern.permute.xlu0 27
  %1066 = vperm.xlu0 %1065, %v283
  %v1067 = vpop.permute.xlu0 %1066
  %v1069 = vmul.f32 %v1067, %v1063
  %v1070 = vmul.f32 %v1067, %v1064
  %v1071 = vadd.f32 %v1045, %v1069
  %v1072 = vadd.f32 %v1046, %v1070
  %1073 = vset.pattern.permute.xlu0 28
  %1074 = vperm.xlu0 %1073, %v219
  %v1075 = vpop.permute.xlu0 %1074
  %1077 = vset.pattern.permute.xlu0 28
  %1078 = vperm.xlu0 %1077, %v224
  %v1079 = vpop.permute.xlu0 %1078
  %v1081 = vlaneseq
  %v1082 = vshrl.u32 %v1081, 7
  %v1083 = vsub.s32 4, %v1082
  %v1084 = vrot.slane %v246, %v1083
  %v1085 = vadd.f32 %v1075, %v1084
  %v1086 = vadd.f32 %v1079, %v1084
  %v1087 = vmul.f32 %v1085, 0.2
  %v1088 = vmul.f32 %v1086, 0.2
  %v1089 = vmax.f32 %v1085, %v1087
  %v1090 = vmax.f32 %v1086, %v1088
  %1091 = vset.pattern.permute.xlu0 28
  %1092 = vperm.xlu0 %1091, %v283
  %v1093 = vpop.permute.xlu0 %1092
  %v1095 = vmul.f32 %v1093, %v1089
  %v1096 = vmul.f32 %v1093, %v1090
  %v1097 = vadd.f32 %v1071, %v1095
  %v1098 = vadd.f32 %v1072, %v1096
  %1099 = vset.pattern.permute.xlu0 29
  %1100 = vperm.xlu0 %1099, %v219
  %v1101 = vpop.permute.xlu0 %1100
  %1103 = vset.pattern.permute.xlu0 29
  %1104 = vperm.xlu0 %1103, %v224
  %v1105 = vpop.permute.xlu0 %1104
  %v1107 = vlaneseq
  %v1108 = vshrl.u32 %v1107, 7
  %v1109 = vsub.s32 5, %v1108
  %v1110 = vrot.slane %v246, %v1109
  %v1111 = vadd.f32 %v1101, %v1110
  %v1112 = vadd.f32 %v1105, %v1110
  %v1113 = vmul.f32 %v1111, 0.2
  %v1114 = vmul.f32 %v1112, 0.2
  %v1115 = vmax.f32 %v1111, %v1113
  %v1116 = vmax.f32 %v1112, %v1114
  %1117 = vset.pattern.permute.xlu0 29
  %1118 = vperm.xlu0 %1117, %v283
  %v1119 = vpop.permute.xlu0 %1118
  %v1121 = vmul.f32 %v1119, %v1115
  %v1122 = vmul.f32 %v1119, %v1116
  %v1123 = vadd.f32 %v1097, %v1121
  %v1124 = vadd.f32 %v1098, %v1122
  %1125 = vset.pattern.permute.xlu0 30
  %1126 = vperm.xlu0 %1125, %v219
  %v1127 = vpop.permute.xlu0 %1126
  %1129 = vset.pattern.permute.xlu0 30
  %1130 = vperm.xlu0 %1129, %v224
  %v1131 = vpop.permute.xlu0 %1130
  %v1133 = vlaneseq
  %v1134 = vshrl.u32 %v1133, 7
  %v1135 = vsub.s32 6, %v1134
  %v1136 = vrot.slane %v246, %v1135
  %v1137 = vadd.f32 %v1127, %v1136
  %v1138 = vadd.f32 %v1131, %v1136
  %v1139 = vmul.f32 %v1137, 0.2
  %v1140 = vmul.f32 %v1138, 0.2
  %v1141 = vmax.f32 %v1137, %v1139
  %v1142 = vmax.f32 %v1138, %v1140
  %1143 = vset.pattern.permute.xlu0 30
  %1144 = vperm.xlu0 %1143, %v283
  %v1145 = vpop.permute.xlu0 %1144
  %v1147 = vmul.f32 %v1145, %v1141
  %v1148 = vmul.f32 %v1145, %v1142
  %v1149 = vadd.f32 %v1123, %v1147
  %v1150 = vadd.f32 %v1124, %v1148
  %1151 = vset.pattern.permute.xlu0 31
  %1152 = vperm.xlu0 %1151, %v219
  %v1153 = vpop.permute.xlu0 %1152
  %1155 = vset.pattern.permute.xlu0 31
  %1156 = vperm.xlu0 %1155, %v224
  %v1157 = vpop.permute.xlu0 %1156
  %v1159 = vlaneseq
  %v1160 = vshrl.u32 %v1159, 7
  %v1161 = vsub.s32 7, %v1160
  %v1162 = vrot.slane %v246, %v1161
  %v1163 = vadd.f32 %v1153, %v1162
  %v1164 = vadd.f32 %v1157, %v1162
  %v1165 = vmul.f32 %v1163, 0.2
  %v1166 = vmul.f32 %v1164, 0.2
  %v1167 = vmax.f32 %v1163, %v1165
  %v1168 = vmax.f32 %v1164, %v1166
  %1169 = vset.pattern.permute.xlu0 31
  %1170 = vperm.xlu0 %1169, %v283
  %v1171 = vpop.permute.xlu0 %1170
  %v1173 = vmul.f32 %v1171, %v1167
  %v1174 = vmul.f32 %v1171, %v1168
  %v1175 = vadd.f32 %v1149, %v1173
  %v1176 = vadd.f32 %v1150, %v1174
  %v1177 = vsel %vm51, %v1175, -1e+30
  %v1178 = vsel %vm52, %v1176, -1e+30
  %v1179 = vsel %vm476, %v1177, -inf
  %1180 = vmax.xlane.f32.xlu0 %v1179
  %v1181 = vpop.xlane.xlu0 %1180
  %v1182 = vsel %vm476, %v1178, -inf
  %1183 = vmax.xlane.f32.xlu0 %v1182
  %v1184 = vpop.xlane.xlu0 %1183
  %v1185 = vsub.f32 %v1177, %v1181
  %v1186 = vsub.f32 %v1178, %v1184
  %v1187 = vmul.f32 %v1185, 1.442695
  %v1188 = vpow.pop %v1187
  %v1189 = vmul.f32 %v1186, 1.442695
  %v1190 = vpow.pop %v1189
  %v1191 = vsel %vm51, %v1188, 0.0
  %v1192 = vsel %vm52, %v1190, 0.0
  %v1193 = vsel %vm476, %v1191, 0.0
  %1194 = vadd.xlane.f32.xlu0 %v1193
  %v1195 = vpop.xlane.xlu0 %1194
  %v1196 = vsel %vm476, %v1192, 0.0
  %1197 = vadd.xlane.f32.xlu0 %v1196
  %v1198 = vpop.xlane.xlu0 %1197
  %v1199 = vrcp.pop %v1195
  %v1200 = vmul.f32 %v1191, %v1199
  %v1201 = vrcp.pop %v1198
  %v1202 = vmul.f32 %v1192, %v1201
  %v1203 = vld [vmem:[%s7] sm:$0x1]
  %v1205 = vlaneseq
  %v1206 = vshrl.u32 %v1205, 7
  %v1207 = vsub.s32 0, %v1206
  %v1208 = vrot.slane %v1203, %v1207
  %v1211 = vsel %vm476, %v498, 0
  %v1214 = vsel %vm476, %v500, 0
  %1216 = vmatprep.subr.mxu0 0.0
  %1217 = vmatpush1.msra.mxu0 %v138
  %1218 = vmatprep.subr.mxu0 0.0
  %1219 = vmatpush1.msra.mxu0 %v143
  %1220 = vmatprep.subr.mxu0 0.0
  %1221 = vmatpush1.msra.mxu0 0.0
  %1222 = vmatprep.subr.mxu0 0.0
  %1223 = vmatpush1.msra.mxu0 0.0
  %1224 = vmatprep.subr.mxu0 0.0
  %1225 = vmatpush1.msra.mxu0 0.0
  %1226 = vmatprep.subr.mxu0 0.0
  %1227 = vmatpush1.msra.mxu0 0.0
  %1228 = vmatprep.subr.mxu0 0.0
  %1229 = vmatpush1.msra.mxu0 0.0
  %1230 = vmatprep.subr.mxu0 0.0
  %1231 = vmatpush1.msra.mxu0 0.0
  %1232 = vmatprep.subr.mxu0 0.0
  %1233 = vmatpush1.msra.mxu0 0.0
  %1234 = vmatprep.subr.mxu0 0.0
  %1235 = vmatpush1.msra.mxu0 0.0
  %1236 = vmatprep.subr.mxu0 0.0
  %1237 = vmatpush1.msra.mxu0 0.0
  %1238 = vmatprep.subr.mxu0 0.0
  %1239 = vmatpush1.msra.mxu0 0.0
  %1240 = vmatprep.subr.mxu0 0.0
  %1241 = vmatpush1.msra.mxu0 0.0
  %1242 = vmatprep.subr.mxu0 0.0
  %1243 = vmatpush1.msra.mxu0 0.0
  %1244 = vmatprep.subr.mxu0 0.0
  %1245 = vmatpush1.msra.mxu0 0.0
  %1246 = vmatprep.subr.mxu0 0.0
  %1247 = vmatpush1.msra.mxu0 0.0
  %1248 = vmatprep.subr.mxu0 0.0
  %1249 = vmatpush1.msra.mxu0 0.0
  %1250 = vmatprep.subr.mxu0 0.0
  %1251 = vmatpush1.msra.mxu0 0.0
  %1252 = vmatprep.subr.mxu0 0.0
  %1253 = vmatpush1.msra.mxu0 0.0
  %1254 = vmatprep.subr.mxu0 0.0
  %1255 = vmatpush1.msra.mxu0 0.0
  %1256 = vmatprep.subr.mxu0 0.0
  %1257 = vmatpush1.msra.mxu0 0.0
  %1258 = vmatprep.subr.mxu0 0.0
  %1259 = vmatpush1.msra.mxu0 0.0
  %1260 = vmatprep.subr.mxu0 0.0
  %1261 = vmatpush1.msra.mxu0 0.0
  %1262 = vmatprep.subr.mxu0 0.0
  %1263 = vmatpush1.msra.mxu0 0.0
  %1264 = vmatprep.subr.mxu0 0.0
  %1265 = vmatpush1.msra.mxu0 0.0
  %1266 = vmatprep.subr.mxu0 0.0
  %1267 = vmatpush1.msra.mxu0 0.0
  %1268 = vmatprep.subr.mxu0 0.0
  %1269 = vmatpush1.msra.mxu0 0.0
  %1270 = vmatprep.subr.mxu0 0.0
  %1271 = vmatpush1.msra.mxu0 0.0
  %1272 = vmatprep.subr.mxu0 0.0
  %1273 = vmatpush1.msra.mxu0 0.0
  %1274 = vmatprep.subr.mxu0 0.0
  %1275 = vmatpush1.msra.mxu0 0.0
  %1276 = vmatprep.subr.mxu0 0.0
  %1277 = vmatpush1.msra.mxu0 0.0
  %1278 = vmatprep.subr.mxu0 0.0
  %1279 = vmatpush1.msra.mxu0 0.0
  %1280 = vmatprep.mubr.f32.mxu0 0.0
  %1281 = vmatmul.mubr.f32.gmra.mrb[0].mxu0 %v1211
  %v1282 = vpop.f32.mrb[0].mxu0
  %v1283 = vadd.f32 %v1208, %v1282
  %v1284 = vpop.f32.mrb[0].mxu0
  %1285 = vmatprep.mubr.f32.mxu0 0.0
  %1286 = vmatmul.mubr.f32.gmra.mrb[0].mxu0 %v1214
  %v1287 = vpop.f32.mrb[0].mxu0
  %v1288 = vadd.f32 %v1208, %v1287
  %v1289 = vpop.f32.mrb[0].mxu0
  %1290 = vdwg.mxu0
  %vm1291 = vcmp.gt.f32.partialorder %v1283, 0.0
  %vm1292 = vcmp.gt.f32.partialorder %v1288, 0.0
  %v1293 = vmul.f32 %v1283, 1.442695
  %v1294 = vpow.pop %v1293
  %v1295 = vmul.f32 %v1288, 1.442695
  %v1296 = vpow.pop %v1295
  %v1297 = vsub.f32 %v1294, 1.0
  %v1298 = vsub.f32 %v1296, 1.0
  %v1299 = vsel %vm1291, %v1283, %v1297
  %v1300 = vsel %vm1292, %v1288, %v1298
  %1301 = vst.msk [vmem:[#allocation2] sm:$0xff] %vm64, %v1299
  %1302 = vst.msk [vmem:[#allocation2 + $0x8] sm:$0xff] %vm64, %v1300
  %v1303 = vld [vmem:[%s7] sm:$0x1]
  %v1305 = vlaneseq
  %v1306 = vshrl.u32 %v1305, 7
  %v1307 = vsub.s32 0, %v1306
  %v1308 = vrot.slane %v1303, %v1307
  %1311 = vrot.lane.b32.xlu0 %v138, 120
  %v1312 = vpop.permute.xlu0 %1311
  %1313 = vrot.lane.b32.xlu0 %v143, 120
  %v1314 = vpop.permute.xlu0 %1313
  %1317 = vrot.lane.b32.xlu0 %v1308, 120
  %v1318 = vpop.permute.xlu0 %1317
  %v1321 = vsel %vm476, %v732, 0
  %v1324 = vsel %vm476, %v734, 0
  %1326 = vmatprep.subr.mxu0 0.0
  %1327 = vmatpush1.msra.mxu0 %v1312
  %1328 = vmatprep.subr.mxu0 0.0
  %1329 = vmatpush1.msra.mxu0 %v1314
  %1330 = vmatprep.subr.mxu0 0.0
  %1331 = vmatpush1.msra.mxu0 0.0
  %1332 = vmatprep.subr.mxu0 0.0
  %1333 = vmatpush1.msra.mxu0 0.0
  %1334 = vmatprep.subr.mxu0 0.0
  %1335 = vmatpush1.msra.mxu0 0.0
  %1336 = vmatprep.subr.mxu0 0.0
  %1337 = vmatpush1.msra.mxu0 0.0
  %1338 = vmatprep.subr.mxu0 0.0
  %1339 = vmatpush1.msra.mxu0 0.0
  %1340 = vmatprep.subr.mxu0 0.0
  %1341 = vmatpush1.msra.mxu0 0.0
  %1342 = vmatprep.subr.mxu0 0.0
  %1343 = vmatpush1.msra.mxu0 0.0
  %1344 = vmatprep.subr.mxu0 0.0
  %1345 = vmatpush1.msra.mxu0 0.0
  %1346 = vmatprep.subr.mxu0 0.0
  %1347 = vmatpush1.msra.mxu0 0.0
  %1348 = vmatprep.subr.mxu0 0.0
  %1349 = vmatpush1.msra.mxu0 0.0
  %1350 = vmatprep.subr.mxu0 0.0
  %1351 = vmatpush1.msra.mxu0 0.0
  %1352 = vmatprep.subr.mxu0 0.0
  %1353 = vmatpush1.msra.mxu0 0.0
  %1354 = vmatprep.subr.mxu0 0.0
  %1355 = vmatpush1.msra.mxu0 0.0
  %1356 = vmatprep.subr.mxu0 0.0
  %1357 = vmatpush1.msra.mxu0 0.0
  %1358 = vmatprep.subr.mxu0 0.0
  %1359 = vmatpush1.msra.mxu0 0.0
  %1360 = vmatprep.subr.mxu0 0.0
  %1361 = vmatpush1.msra.mxu0 0.0
  %1362 = vmatprep.subr.mxu0 0.0
  %1363 = vmatpush1.msra.mxu0 0.0
  %1364 = vmatprep.subr.mxu0 0.0
  %1365 = vmatpush1.msra.mxu0 0.0
  %1366 = vmatprep.subr.mxu0 0.0
  %1367 = vmatpush1.msra.mxu0 0.0
  %1368 = vmatprep.subr.mxu0 0.0
  %1369 = vmatpush1.msra.mxu0 0.0
  %1370 = vmatprep.subr.mxu0 0.0
  %1371 = vmatpush1.msra.mxu0 0.0
  %1372 = vmatprep.subr.mxu0 0.0
  %1373 = vmatpush1.msra.mxu0 0.0
  %1374 = vmatprep.subr.mxu0 0.0
  %1375 = vmatpush1.msra.mxu0 0.0
  %1376 = vmatprep.subr.mxu0 0.0
  %1377 = vmatpush1.msra.mxu0 0.0
  %1378 = vmatprep.subr.mxu0 0.0
  %1379 = vmatpush1.msra.mxu0 0.0
  %1380 = vmatprep.subr.mxu0 0.0
  %1381 = vmatpush1.msra.mxu0 0.0
  %1382 = vmatprep.subr.mxu0 0.0
  %1383 = vmatpush1.msra.mxu0 0.0
  %1384 = vmatprep.subr.mxu0 0.0
  %1385 = vmatpush1.msra.mxu0 0.0
  %1386 = vmatprep.subr.mxu0 0.0
  %1387 = vmatpush1.msra.mxu0 0.0
  %1388 = vmatprep.subr.mxu0 0.0
  %1389 = vmatpush1.msra.mxu0 0.0
  %1390 = vmatprep.mubr.f32.mxu0 0.0
  %1391 = vmatmul.mubr.f32.gmra.mrb[0].mxu0 %v1321
  %v1392 = vpop.f32.mrb[0].mxu0
  %v1393 = vadd.f32 %v1318, %v1392
  %v1394 = vpop.f32.mrb[0].mxu0
  %1395 = vmatprep.mubr.f32.mxu0 0.0
  %1396 = vmatmul.mubr.f32.gmra.mrb[0].mxu0 %v1324
  %v1397 = vpop.f32.mrb[0].mxu0
  %v1398 = vadd.f32 %v1318, %v1397
  %v1399 = vpop.f32.mrb[0].mxu0
  %1400 = vdwg.mxu0
  %vm1401 = vcmp.gt.f32.partialorder %v1393, 0.0
  %vm1402 = vcmp.gt.f32.partialorder %v1398, 0.0
  %v1403 = vmul.f32 %v1393, 1.442695
  %v1404 = vpow.pop %v1403
  %v1405 = vmul.f32 %v1398, 1.442695
  %v1406 = vpow.pop %v1405
  %v1407 = vsub.f32 %v1404, 1.0
  %v1408 = vsub.f32 %v1406, 1.0
  %v1409 = vsel %vm1401, %v1393, %v1407
  %v1410 = vsel %vm1402, %v1398, %v1408
  %1413 = vrot.lane.b32.xlu0 %v1409, 8
  %v1414 = vpop.permute.xlu0 %1413
  %1415 = vrot.lane.b32.xlu0 %v1410, 8
  %v1416 = vpop.permute.xlu0 %1415
  %vm1419 = vcmask 130112
  %1420 = vst.msk [vmem:[#allocation2] sm:$0xff] %vm1419, %v1414
  %1421 = vst.msk [vmem:[#allocation2 + $0x8] sm:$0xff] %vm1419, %v1416
  %v1422 = vld [vmem:[%s7] sm:$0x1]
  %v1424 = vlaneseq
  %v1425 = vshrl.u32 %v1424, 7
  %v1426 = vsub.s32 0, %v1425
  %v1427 = vrot.slane %v1422, %v1426
  %1428 = vrot.lane.b32.xlu0 %v138, 112
  %v1429 = vpop.permute.xlu0 %1428
  %1430 = vrot.lane.b32.xlu0 %v143, 112
  %v1431 = vpop.permute.xlu0 %1430
  %1434 = vrot.lane.b32.xlu0 %v1427, 112
  %v1435 = vpop.permute.xlu0 %1434
  %v1438 = vsel %vm476, %v966, 0
  %v1441 = vsel %vm476, %v968, 0
  %1443 = vmatprep.subr.mxu0 0.0
  %1444 = vmatpush1.msra.mxu0 %v1429
  %1445 = vmatprep.subr.mxu0 0.0
  %1446 = vmatpush1.msra.mxu0 %v1431
  %1447 = vmatprep.subr.mxu0 0.0
  %1448 = vmatpush1.msra.mxu0 0.0
  %1449 = vmatprep.subr.mxu0 0.0
  %1450 = vmatpush1.msra.mxu0 0.0
  %1451 = vmatprep.subr.mxu0 0.0
  %1452 = vmatpush1.msra.mxu0 0.0
  %1453 = vmatprep.subr.mxu0 0.0
  %1454 = vmatpush1.msra.mxu0 0.0
  %1455 = vmatprep.subr.mxu0 0.0
  %1456 = vmatpush1.msra.mxu0 0.0
  %1457 = vmatprep.subr.mxu0 0.0
  %1458 = vmatpush1.msra.mxu0 0.0
  %1459 = vmatprep.subr.mxu0 0.0
  %1460 = vmatpush1.msra.mxu0 0.0
  %1461 = vmatprep.subr.mxu0 0.0
  %1462 = vmatpush1.msra.mxu0 0.0
  %1463 = vmatprep.subr.mxu0 0.0
  %1464 = vmatpush1.msra.mxu0 0.0
  %1465 = vmatprep.subr.mxu0 0.0
  %1466 = vmatpush1.msra.mxu0 0.0
  %1467 = vmatprep.subr.mxu0 0.0
  %1468 = vmatpush1.msra.mxu0 0.0
  %1469 = vmatprep.subr.mxu0 0.0
  %1470 = vmatpush1.msra.mxu0 0.0
  %1471 = vmatprep.subr.mxu0 0.0
  %1472 = vmatpush1.msra.mxu0 0.0
  %1473 = vmatprep.subr.mxu0 0.0
  %1474 = vmatpush1.msra.mxu0 0.0
  %1475 = vmatprep.subr.mxu0 0.0
  %1476 = vmatpush1.msra.mxu0 0.0
  %1477 = vmatprep.subr.mxu0 0.0
  %1478 = vmatpush1.msra.mxu0 0.0
  %1479 = vmatprep.subr.mxu0 0.0
  %1480 = vmatpush1.msra.mxu0 0.0
  %1481 = vmatprep.subr.mxu0 0.0
  %1482 = vmatpush1.msra.mxu0 0.0
  %1483 = vmatprep.subr.mxu0 0.0
  %1484 = vmatpush1.msra.mxu0 0.0
  %1485 = vmatprep.subr.mxu0 0.0
  %1486 = vmatpush1.msra.mxu0 0.0
  %1487 = vmatprep.subr.mxu0 0.0
  %1488 = vmatpush1.msra.mxu0 0.0
  %1489 = vmatprep.subr.mxu0 0.0
  %1490 = vmatpush1.msra.mxu0 0.0
  %1491 = vmatprep.subr.mxu0 0.0
  %1492 = vmatpush1.msra.mxu0 0.0
  %1493 = vmatprep.subr.mxu0 0.0
  %1494 = vmatpush1.msra.mxu0 0.0
  %1495 = vmatprep.subr.mxu0 0.0
  %1496 = vmatpush1.msra.mxu0 0.0
  %1497 = vmatprep.subr.mxu0 0.0
  %1498 = vmatpush1.msra.mxu0 0.0
  %1499 = vmatprep.subr.mxu0 0.0
  %1500 = vmatpush1.msra.mxu0 0.0
  %1501 = vmatprep.subr.mxu0 0.0
  %1502 = vmatpush1.msra.mxu0 0.0
  %1503 = vmatprep.subr.mxu0 0.0
  %1504 = vmatpush1.msra.mxu0 0.0
  %1505 = vmatprep.subr.mxu0 0.0
  %1506 = vmatpush1.msra.mxu0 0.0
  %1507 = vmatprep.mubr.f32.mxu0 0.0
  %1508 = vmatmul.mubr.f32.gmra.mrb[0].mxu0 %v1438
  %v1509 = vpop.f32.mrb[0].mxu0
  %v1510 = vadd.f32 %v1435, %v1509
  %v1511 = vpop.f32.mrb[0].mxu0
  %1512 = vmatprep.mubr.f32.mxu0 0.0
  %1513 = vmatmul.mubr.f32.gmra.mrb[0].mxu0 %v1441
  %v1514 = vpop.f32.mrb[0].mxu0
  %v1515 = vadd.f32 %v1435, %v1514
  %v1516 = vpop.f32.mrb[0].mxu0
  %1517 = vdwg.mxu0
  %vm1518 = vcmp.gt.f32.partialorder %v1510, 0.0
  %vm1519 = vcmp.gt.f32.partialorder %v1515, 0.0
  %v1520 = vmul.f32 %v1510, 1.442695
  %v1521 = vpow.pop %v1520
  %v1522 = vmul.f32 %v1515, 1.442695
  %v1523 = vpow.pop %v1522
  %v1524 = vsub.f32 %v1521, 1.0
  %v1525 = vsub.f32 %v1523, 1.0
  %v1526 = vsel %vm1518, %v1510, %v1524
  %v1527 = vsel %vm1519, %v1515, %v1525
  %1530 = vrot.lane.b32.xlu0 %v1526, 16
  %v1531 = vpop.permute.xlu0 %1530
  %1532 = vrot.lane.b32.xlu0 %v1527, 16
  %v1533 = vpop.permute.xlu0 %1532
  %vm1536 = vcmask 195712
  %1537 = vst.msk [vmem:[#allocation2] sm:$0xff] %vm1536, %v1531
  %1538 = vst.msk [vmem:[#allocation2 + $0x8] sm:$0xff] %vm1536, %v1533
  %v1539 = vld [vmem:[%s7] sm:$0x1]
  %v1541 = vlaneseq
  %v1542 = vshrl.u32 %v1541, 7
  %v1543 = vsub.s32 0, %v1542
  %v1544 = vrot.slane %v1539, %v1543
  %1545 = vrot.lane.b32.xlu0 %v138, 104
  %v1546 = vpop.permute.xlu0 %1545
  %1547 = vrot.lane.b32.xlu0 %v143, 104
  %v1548 = vpop.permute.xlu0 %1547
  %1551 = vrot.lane.b32.xlu0 %v1544, 104
  %v1552 = vpop.permute.xlu0 %1551
  %v1555 = vsel %vm476, %v1200, 0
  %v1558 = vsel %vm476, %v1202, 0
  %1560 = vmatprep.subr.mxu0 0.0
  %1561 = vmatpush1.msra.mxu0 %v1546
  %1562 = vmatprep.subr.mxu0 0.0
  %1563 = vmatpush1.msra.mxu0 %v1548
  %1564 = vmatprep.subr.mxu0 0.0
  %1565 = vmatpush1.msra.mxu0 0.0
  %1566 = vmatprep.subr.mxu0 0.0
  %1567 = vmatpush1.msra.mxu0 0.0
  %1568 = vmatprep.subr.mxu0 0.0
  %1569 = vmatpush1.msra.mxu0 0.0
  %1570 = vmatprep.subr.mxu0 0.0
  %1571 = vmatpush1.msra.mxu0 0.0
  %1572 = vmatprep.subr.mxu0 0.0
  %1573 = vmatpush1.msra.mxu0 0.0
  %1574 = vmatprep.subr.mxu0 0.0
  %1575 = vmatpush1.msra.mxu0 0.0
  %1576 = vmatprep.subr.mxu0 0.0
  %1577 = vmatpush1.msra.mxu0 0.0
  %1578 = vmatprep.subr.mxu0 0.0
  %1579 = vmatpush1.msra.mxu0 0.0
  %1580 = vmatprep.subr.mxu0 0.0
  %1581 = vmatpush1.msra.mxu0 0.0
  %1582 = vmatprep.subr.mxu0 0.0
  %1583 = vmatpush1.msra.mxu0 0.0
  %1584 = vmatprep.subr.mxu0 0.0
  %1585 = vmatpush1.msra.mxu0 0.0
  %1586 = vmatprep.subr.mxu0 0.0
  %1587 = vmatpush1.msra.mxu0 0.0
  %1588 = vmatprep.subr.mxu0 0.0
  %1589 = vmatpush1.msra.mxu0 0.0
  %1590 = vmatprep.subr.mxu0 0.0
  %1591 = vmatpush1.msra.mxu0 0.0
  %1592 = vmatprep.subr.mxu0 0.0
  %1593 = vmatpush1.msra.mxu0 0.0
  %1594 = vmatprep.subr.mxu0 0.0
  %1595 = vmatpush1.msra.mxu0 0.0
  %1596 = vmatprep.subr.mxu0 0.0
  %1597 = vmatpush1.msra.mxu0 0.0
  %1598 = vmatprep.subr.mxu0 0.0
  %1599 = vmatpush1.msra.mxu0 0.0
  %1600 = vmatprep.subr.mxu0 0.0
  %1601 = vmatpush1.msra.mxu0 0.0
  %1602 = vmatprep.subr.mxu0 0.0
  %1603 = vmatpush1.msra.mxu0 0.0
  %1604 = vmatprep.subr.mxu0 0.0
  %1605 = vmatpush1.msra.mxu0 0.0
  %1606 = vmatprep.subr.mxu0 0.0
  %1607 = vmatpush1.msra.mxu0 0.0
  %1608 = vmatprep.subr.mxu0 0.0
  %1609 = vmatpush1.msra.mxu0 0.0
  %1610 = vmatprep.subr.mxu0 0.0
  %1611 = vmatpush1.msra.mxu0 0.0
  %1612 = vmatprep.subr.mxu0 0.0
  %1613 = vmatpush1.msra.mxu0 0.0
  %1614 = vmatprep.subr.mxu0 0.0
  %1615 = vmatpush1.msra.mxu0 0.0
  %1616 = vmatprep.subr.mxu0 0.0
  %1617 = vmatpush1.msra.mxu0 0.0
  %1618 = vmatprep.subr.mxu0 0.0
  %1619 = vmatpush1.msra.mxu0 0.0
  %1620 = vmatprep.subr.mxu0 0.0
  %1621 = vmatpush1.msra.mxu0 0.0
  %1622 = vmatprep.subr.mxu0 0.0
  %1623 = vmatpush1.msra.mxu0 0.0
  %1624 = vmatprep.mubr.f32.mxu0 0.0
  %1625 = vmatmul.mubr.f32.gmra.mrb[0].mxu0 %v1555
  %v1626 = vpop.f32.mrb[0].mxu0
  %v1627 = vadd.f32 %v1552, %v1626
  %v1628 = vpop.f32.mrb[0].mxu0
  %1629 = vmatprep.mubr.f32.mxu0 0.0
  %1630 = vmatmul.mubr.f32.gmra.mrb[0].mxu0 %v1558
  %v1631 = vpop.f32.mrb[0].mxu0
  %v1632 = vadd.f32 %v1552, %v1631
  %v1633 = vpop.f32.mrb[0].mxu0
  %1634 = vdwg.mxu0
  %vm1635 = vcmp.gt.f32.partialorder %v1627, 0.0
  %vm1636 = vcmp.gt.f32.partialorder %v1632, 0.0
  %v1637 = vmul.f32 %v1627, 1.442695
  %v1638 = vpow.pop %v1637
  %v1639 = vmul.f32 %v1632, 1.442695
  %v1640 = vpow.pop %v1639
  %v1641 = vsub.f32 %v1638, 1.0
  %v1642 = vsub.f32 %v1640, 1.0
  %v1643 = vsel %vm1635, %v1627, %v1641
  %v1644 = vsel %vm1636, %v1632, %v1642
  %1647 = vrot.lane.b32.xlu0 %v1643, 24
  %v1648 = vpop.permute.xlu0 %1647
  %1649 = vrot.lane.b32.xlu0 %v1644, 24
  %v1650 = vpop.permute.xlu0 %1649
  %vm1653 = vcmask 261312
  %1654 = vst.msk [vmem:[#allocation2] sm:$0xff] %vm1653, %v1648
  %1655 = vst.msk [vmem:[#allocation2 + $0x8] sm:$0xff] %vm1653, %v1650
  %v1656 = vld [vmem:[#allocation2] sm:$0xff]
  %v1657 = vld [vmem:[#allocation2 + $0x8] sm:$0xff]
  %v1658 = vld [vmem:[%s8] sm:$0xff]
  %v1659 = vld [vmem:[%s8 + $0x8] sm:$0xff]
  %v1660 = vld [vmem:[%s8 + $0x10] sm:$0xff]
  %v1661 = vld [vmem:[%s8 + $0x18] sm:$0xff]
  %v1662 = vld [vmem:[%s9] sm:$0xff]
  %v1663 = vld [vmem:[%s9 + $0x8] sm:$0xff]
  %v1664 = vld [vmem:[%s9 + $0x10] sm:$0xff]
  %v1665 = vld [vmem:[%s9 + $0x18] sm:$0xff]
  %v1666 = vld [vmem:[%s10] sm:$0x1]
  %v1667 = vld [vmem:[%s11] sm:$0x1]
  %v1668 = vld [vmem:[%s12] sm:$0x1]
  %v1670 = vlaneseq
  %v1671 = vshrl.u32 %v1670, 7
  %v1672 = vsub.s32 0, %v1671
  %v1673 = vrot.slane %v1666, %v1672
  %vm1675 = vcmask 261120
  %v1677 = vsel %vm1675, %v1656, 0
  %v1680 = vsel %vm1675, %v1657, 0
  %1682 = vmatprep.subr.mxu0 0.0
  %1683 = vmatpush1.msra.mxu0 %v1658
  %1684 = vmatprep.subr.mxu0 0.0
  %1685 = vmatpush1.msra.mxu0 %v1659
  %1686 = vmatprep.subr.mxu0 0.0
  %1687 = vmatpush1.msra.mxu0 %v1660
  %1688 = vmatprep.subr.mxu0 0.0
  %1689 = vmatpush1.msra.mxu0 %v1661
  %1690 = vmatprep.subr.mxu0 0.0
  %1691 = vmatpush1.msra.mxu0 0.0
  %1692 = vmatprep.subr.mxu0 0.0
  %1693 = vmatpush1.msra.mxu0 0.0
  %1694 = vmatprep.subr.mxu0 0.0
  %1695 = vmatpush1.msra.mxu0 0.0
  %1696 = vmatprep.subr.mxu0 0.0
  %1697 = vmatpush1.msra.mxu0 0.0
  %1698 = vmatprep.subr.mxu0 0.0
  %1699 = vmatpush1.msra.mxu0 0.0
  %1700 = vmatprep.subr.mxu0 0.0
  %1701 = vmatpush1.msra.mxu0 0.0
  %1702 = vmatprep.subr.mxu0 0.0
  %1703 = vmatpush1.msra.mxu0 0.0
  %1704 = vmatprep.subr.mxu0 0.0
  %1705 = vmatpush1.msra.mxu0 0.0
  %1706 = vmatprep.subr.mxu0 0.0
  %1707 = vmatpush1.msra.mxu0 0.0
  %1708 = vmatprep.subr.mxu0 0.0
  %1709 = vmatpush1.msra.mxu0 0.0
  %1710 = vmatprep.subr.mxu0 0.0
  %1711 = vmatpush1.msra.mxu0 0.0
  %1712 = vmatprep.subr.mxu0 0.0
  %1713 = vmatpush1.msra.mxu0 0.0
  %1714 = vmatprep.subr.mxu0 0.0
  %1715 = vmatpush1.msra.mxu0 0.0
  %1716 = vmatprep.subr.mxu0 0.0
  %1717 = vmatpush1.msra.mxu0 0.0
  %1718 = vmatprep.subr.mxu0 0.0
  %1719 = vmatpush1.msra.mxu0 0.0
  %1720 = vmatprep.subr.mxu0 0.0
  %1721 = vmatpush1.msra.mxu0 0.0
  %1722 = vmatprep.subr.mxu0 0.0
  %1723 = vmatpush1.msra.mxu0 0.0
  %1724 = vmatprep.subr.mxu0 0.0
  %1725 = vmatpush1.msra.mxu0 0.0
  %1726 = vmatprep.subr.mxu0 0.0
  %1727 = vmatpush1.msra.mxu0 0.0
  %1728 = vmatprep.subr.mxu0 0.0
  %1729 = vmatpush1.msra.mxu0 0.0
  %1730 = vmatprep.subr.mxu0 0.0
  %1731 = vmatpush1.msra.mxu0 0.0
  %1732 = vmatprep.subr.mxu0 0.0
  %1733 = vmatpush1.msra.mxu0 0.0
  %1734 = vmatprep.subr.mxu0 0.0
  %1735 = vmatpush1.msra.mxu0 0.0
  %1736 = vmatprep.subr.mxu0 0.0
  %1737 = vmatpush1.msra.mxu0 0.0
  %1738 = vmatprep.subr.mxu0 0.0
  %1739 = vmatpush1.msra.mxu0 0.0
  %1740 = vmatprep.subr.mxu0 0.0
  %1741 = vmatpush1.msra.mxu0 0.0
  %1742 = vmatprep.subr.mxu0 0.0
  %1743 = vmatpush1.msra.mxu0 0.0
  %1744 = vmatprep.subr.mxu0 0.0
  %1745 = vmatpush1.msra.mxu0 0.0
  %1746 = vmatprep.mubr.f32.mxu0 0.0
  %1747 = vmatmul.mubr.f32.gmra.mrb[0].mxu0 %v1677
  %v1748 = vpop.f32.mrb[0].mxu0
  %v1749 = vadd.f32 %v1673, %v1748
  %v1750 = vpop.f32.mrb[0].mxu0
  %1751 = vmatprep.mubr.f32.mxu0 0.0
  %1752 = vmatmul.mubr.f32.gmra.mrb[0].mxu0 %v1680
  %v1753 = vpop.f32.mrb[0].mxu0
  %v1754 = vadd.f32 %v1673, %v1753
  %v1755 = vpop.f32.mrb[0].mxu0
  %1756 = vdwg.mxu0
  %v1758 = vlaneseq
  %v1759 = vshrl.u32 %v1758, 7
  %v1760 = vsub.s32 0, %v1759
  %v1761 = vrot.slane %v1667, %v1760
  %1763 = vmatprep.subr.mxu0 0.0
  %1764 = vmatpush1.msra.mxu0 %v1662
  %1765 = vmatprep.subr.mxu0 0.0
  %1766 = vmatpush1.msra.mxu0 %v1663
  %1767 = vmatprep.subr.mxu0 0.0
  %1768 = vmatpush1.msra.mxu0 %v1664
  %1769 = vmatprep.subr.mxu0 0.0
  %1770 = vmatpush1.msra.mxu0 %v1665
  %1771 = vmatprep.subr.mxu0 0.0
  %1772 = vmatpush1.msra.mxu0 0.0
  %1773 = vmatprep.subr.mxu0 0.0
  %1774 = vmatpush1.msra.mxu0 0.0
  %1775 = vmatprep.subr.mxu0 0.0
  %1776 = vmatpush1.msra.mxu0 0.0
  %1777 = vmatprep.subr.mxu0 0.0
  %1778 = vmatpush1.msra.mxu0 0.0
  %1779 = vmatprep.subr.mxu0 0.0
  %1780 = vmatpush1.msra.mxu0 0.0
  %1781 = vmatprep.subr.mxu0 0.0
  %1782 = vmatpush1.msra.mxu0 0.0
  %1783 = vmatprep.subr.mxu0 0.0
  %1784 = vmatpush1.msra.mxu0 0.0
  %1785 = vmatprep.subr.mxu0 0.0
  %1786 = vmatpush1.msra.mxu0 0.0
  %1787 = vmatprep.subr.mxu0 0.0
  %1788 = vmatpush1.msra.mxu0 0.0
  %1789 = vmatprep.subr.mxu0 0.0
  %1790 = vmatpush1.msra.mxu0 0.0
  %1791 = vmatprep.subr.mxu0 0.0
  %1792 = vmatpush1.msra.mxu0 0.0
  %1793 = vmatprep.subr.mxu0 0.0
  %1794 = vmatpush1.msra.mxu0 0.0
  %1795 = vmatprep.subr.mxu0 0.0
  %1796 = vmatpush1.msra.mxu0 0.0
  %1797 = vmatprep.subr.mxu0 0.0
  %1798 = vmatpush1.msra.mxu0 0.0
  %1799 = vmatprep.subr.mxu0 0.0
  %1800 = vmatpush1.msra.mxu0 0.0
  %1801 = vmatprep.subr.mxu0 0.0
  %1802 = vmatpush1.msra.mxu0 0.0
  %1803 = vmatprep.subr.mxu0 0.0
  %1804 = vmatpush1.msra.mxu0 0.0
  %1805 = vmatprep.subr.mxu0 0.0
  %1806 = vmatpush1.msra.mxu0 0.0
  %1807 = vmatprep.subr.mxu0 0.0
  %1808 = vmatpush1.msra.mxu0 0.0
  %1809 = vmatprep.subr.mxu0 0.0
  %1810 = vmatpush1.msra.mxu0 0.0
  %1811 = vmatprep.subr.mxu0 0.0
  %1812 = vmatpush1.msra.mxu0 0.0
  %1813 = vmatprep.subr.mxu0 0.0
  %1814 = vmatpush1.msra.mxu0 0.0
  %1815 = vmatprep.subr.mxu0 0.0
  %1816 = vmatpush1.msra.mxu0 0.0
  %1817 = vmatprep.subr.mxu0 0.0
  %1818 = vmatpush1.msra.mxu0 0.0
  %1819 = vmatprep.subr.mxu0 0.0
  %1820 = vmatpush1.msra.mxu0 0.0
  %1821 = vmatprep.subr.mxu0 0.0
  %1822 = vmatpush1.msra.mxu0 0.0
  %1823 = vmatprep.subr.mxu0 0.0
  %1824 = vmatpush1.msra.mxu0 0.0
  %1825 = vmatprep.subr.mxu0 0.0
  %1826 = vmatpush1.msra.mxu0 0.0
  %1827 = vmatprep.mubr.f32.mxu0 0.0
  %1828 = vmatmul.mubr.f32.gmra.mrb[0].mxu0 %v1677
  %v1829 = vpop.f32.mrb[0].mxu0
  %v1830 = vadd.f32 %v1761, %v1829
  %v1831 = vpop.f32.mrb[0].mxu0
  %1832 = vmatprep.mubr.f32.mxu0 0.0
  %1833 = vmatmul.mubr.f32.gmra.mrb[0].mxu0 %v1680
  %v1834 = vpop.f32.mrb[0].mxu0
  %v1835 = vadd.f32 %v1761, %v1834
  %v1836 = vpop.f32.mrb[0].mxu0
  %1837 = vdwg.mxu0
  %1838 = vxpose.xlu0.b32.start [1/16] %v1749, 128
  %1839 = vxpose.xlu0.b32.cont [2/16] %v1754, 128
  %1840 = vxpose.xlu0.b32.cont [3/16] 0.0, 128
  %1841 = vxpose.xlu0.b32.cont [4/16] 0.0, 128
  %1842 = vxpose.xlu0.b32.cont [5/16] 0.0, 128
  %1843 = vxpose.xlu0.b32.cont [6/16] 0.0, 128
  %1844 = vxpose.xlu0.b32.cont [7/16] 0.0, 128
  %1845 = vxpose.xlu0.b32.cont [8/16] 0.0, 128
  %1846 = vxpose.xlu0.b32.cont [9/16] 0.0, 128
  %1847 = vxpose.xlu0.b32.cont [10/16] 0.0, 128
  %1848 = vxpose.xlu0.b32.cont [11/16] 0.0, 128
  %1849 = vxpose.xlu0.b32.cont [12/16] 0.0, 128
  %1850 = vxpose.xlu0.b32.cont [13/16] 0.0, 128
  %1851 = vxpose.xlu0.b32.cont [14/16] 0.0, 128
  %1852 = vxpose.xlu0.b32.cont [15/16] 0.0, 128
  %1853 = vxpose.xlu0.b32.end [16/16] 0.0, 128
  %v1854 = vpop.trf.xlu0
  %v1855 = vpop.trf.xlu0
  %v1856 = vpop.trf.xlu0
  %v1857 = vpop.trf.xlu0
  %v1858 = vpop.trf.xlu0
  %v1859 = vpop.trf.xlu0
  %v1860 = vpop.trf.xlu0
  %v1861 = vpop.trf.xlu0
  %v1862 = vpop.trf.xlu0
  %v1863 = vpop.trf.xlu0
  %v1864 = vpop.trf.xlu0
  %v1865 = vpop.trf.xlu0
  %v1866 = vpop.trf.xlu0
  %v1867 = vpop.trf.xlu0
  %v1868 = vpop.trf.xlu0
  %v1869 = vpop.trf.xlu0
  %1871 = vset.pattern.permute.xlu0 0
  %1872 = vperm.xlu0 %1871, %v1830
  %v1873 = vpop.permute.xlu0 %1872
  %1876 = vset.pattern.permute.xlu0 0
  %1877 = vperm.xlu0 %1876, %v1835
  %v1878 = vpop.permute.xlu0 %1877
  %v1880 = vlaneseq
  %v1881 = vshrl.u32 %v1880, 7
  %v1882 = vsub.s32 0, %v1881
  %v1883 = vrot.slane %v1854, %v1882
  %v1884 = vadd.f32 %v1873, %v1883
  %v1885 = vadd.f32 %v1878, %v1883
  %v1886 = vmul.f32 %v1884, 0.2
  %v1887 = vmul.f32 %v1885, 0.2
  %v1888 = vmax.f32 %v1884, %v1886
  %v1889 = vmax.f32 %v1885, %v1887
  %v1891 = vlaneseq
  %v1892 = vshrl.u32 %v1891, 7
  %v1893 = vsub.s32 0, %v1892
  %v1894 = vrot.slane %v1668, %v1893
  %1895 = vset.pattern.permute.xlu0 0
  %1896 = vperm.xlu0 %1895, %v1894
  %v1897 = vpop.permute.xlu0 %1896
  %v1899 = vmul.f32 %v1897, %v1888
  %v1900 = vmul.f32 %v1897, %v1889
  %v1901 = vadd.f32 %v1899, 0.0
  %v1902 = vadd.f32 %v1900, 0.0
  %1903 = vset.pattern.permute.xlu0 1
  %1904 = vperm.xlu0 %1903, %v1830
  %v1905 = vpop.permute.xlu0 %1904
  %1907 = vset.pattern.permute.xlu0 1
  %1908 = vperm.xlu0 %1907, %v1835
  %v1909 = vpop.permute.xlu0 %1908
  %v1911 = vlaneseq
  %v1912 = vshrl.u32 %v1911, 7
  %v1913 = vsub.s32 1, %v1912
  %v1914 = vrot.slane %v1854, %v1913
  %v1915 = vadd.f32 %v1905, %v1914
  %v1916 = vadd.f32 %v1909, %v1914
  %v1917 = vmul.f32 %v1915, 0.2
  %v1918 = vmul.f32 %v1916, 0.2
  %v1919 = vmax.f32 %v1915, %v1917
  %v1920 = vmax.f32 %v1916, %v1918
  %1921 = vset.pattern.permute.xlu0 1
  %1922 = vperm.xlu0 %1921, %v1894
  %v1923 = vpop.permute.xlu0 %1922
  %v1925 = vmul.f32 %v1923, %v1919
  %v1926 = vmul.f32 %v1923, %v1920
  %v1927 = vadd.f32 %v1901, %v1925
  %v1928 = vadd.f32 %v1902, %v1926
  %1929 = vset.pattern.permute.xlu0 2
  %1930 = vperm.xlu0 %1929, %v1830
  %v1931 = vpop.permute.xlu0 %1930
  %1933 = vset.pattern.permute.xlu0 2
  %1934 = vperm.xlu0 %1933, %v1835
  %v1935 = vpop.permute.xlu0 %1934
  %v1937 = vlaneseq
  %v1938 = vshrl.u32 %v1937, 7
  %v1939 = vsub.s32 2, %v1938
  %v1940 = vrot.slane %v1854, %v1939
  %v1941 = vadd.f32 %v1931, %v1940
  %v1942 = vadd.f32 %v1935, %v1940
  %v1943 = vmul.f32 %v1941, 0.2
  %v1944 = vmul.f32 %v1942, 0.2
  %v1945 = vmax.f32 %v1941, %v1943
  %v1946 = vmax.f32 %v1942, %v1944
  %1947 = vset.pattern.permute.xlu0 2
  %1948 = vperm.xlu0 %1947, %v1894
  %v1949 = vpop.permute.xlu0 %1948
  %v1951 = vmul.f32 %v1949, %v1945
  %v1952 = vmul.f32 %v1949, %v1946
  %v1953 = vadd.f32 %v1927, %v1951
  %v1954 = vadd.f32 %v1928, %v1952
  %1955 = vset.pattern.permute.xlu0 3
  %1956 = vperm.xlu0 %1955, %v1830
  %v1957 = vpop.permute.xlu0 %1956
  %1959 = vset.pattern.permute.xlu0 3
  %1960 = vperm.xlu0 %1959, %v1835
  %v1961 = vpop.permute.xlu0 %1960
  %v1963 = vlaneseq
  %v1964 = vshrl.u32 %v1963, 7
  %v1965 = vsub.s32 3, %v1964
  %v1966 = vrot.slane %v1854, %v1965
  %v1967 = vadd.f32 %v1957, %v1966
  %v1968 = vadd.f32 %v1961, %v1966
  %v1969 = vmul.f32 %v1967, 0.2
  %v1970 = vmul.f32 %v1968, 0.2
  %v1971 = vmax.f32 %v1967, %v1969
  %v1972 = vmax.f32 %v1968, %v1970
  %1973 = vset.pattern.permute.xlu0 3
  %1974 = vperm.xlu0 %1973, %v1894
  %v1975 = vpop.permute.xlu0 %1974
  %v1977 = vmul.f32 %v1975, %v1971
  %v1978 = vmul.f32 %v1975, %v1972
  %v1979 = vadd.f32 %v1953, %v1977
  %v1980 = vadd.f32 %v1954, %v1978
  %v1981 = vsel %vm51, %v1979, -1e+30
  %v1982 = vsel %vm52, %v1980, -1e+30
  %v1983 = vsel %vm476, %v1981, -inf
  %1984 = vmax.xlane.f32.xlu0 %v1983
  %v1985 = vpop.xlane.xlu0 %1984
  %v1986 = vsel %vm476, %v1982, -inf
  %1987 = vmax.xlane.f32.xlu0 %v1986
  %v1988 = vpop.xlane.xlu0 %1987
  %v1989 = vsub.f32 %v1981, %v1985
  %v1990 = vsub.f32 %v1982, %v1988
  %v1991 = vmul.f32 %v1989, 1.442695
  %v1992 = vpow.pop %v1991
  %v1993 = vmul.f32 %v1990, 1.442695
  %v1994 = vpow.pop %v1993
  %v1995 = vsel %vm51, %v1992, 0.0
  %v1996 = vsel %vm52, %v1994, 0.0
  %v1997 = vsel %vm476, %v1995, 0.0
  %1998 = vadd.xlane.f32.xlu0 %v1997
  %v1999 = vpop.xlane.xlu0 %1998
  %v2000 = vsel %vm476, %v1996, 0.0
  %2001 = vadd.xlane.f32.xlu0 %v2000
  %v2002 = vpop.xlane.xlu0 %2001
  %v2003 = vrcp.pop %v1999
  %v2004 = vmul.f32 %v1995, %v2003
  %v2005 = vrcp.pop %v2002
  %v2006 = vmul.f32 %v1996, %v2005
  %v2007 = vld [vmem:[%s13] sm:$0x1]
  %v2009 = vlaneseq
  %v2010 = vshrl.u32 %v2009, 7
  %v2011 = vsub.s32 0, %v2010
  %v2012 = vrot.slane %v2007, %v2011
  %v2015 = vsel %vm476, %v2004, 0
  %v2018 = vsel %vm476, %v2006, 0
  %2020 = vmatprep.subr.mxu0 0.0
  %2021 = vmatpush1.msra.mxu0 %v1749
  %2022 = vmatprep.subr.mxu0 0.0
  %2023 = vmatpush1.msra.mxu0 %v1754
  %2024 = vmatprep.subr.mxu0 0.0
  %2025 = vmatpush1.msra.mxu0 0.0
  %2026 = vmatprep.subr.mxu0 0.0
  %2027 = vmatpush1.msra.mxu0 0.0
  %2028 = vmatprep.subr.mxu0 0.0
  %2029 = vmatpush1.msra.mxu0 0.0
  %2030 = vmatprep.subr.mxu0 0.0
  %2031 = vmatpush1.msra.mxu0 0.0
  %2032 = vmatprep.subr.mxu0 0.0
  %2033 = vmatpush1.msra.mxu0 0.0
  %2034 = vmatprep.subr.mxu0 0.0
  %2035 = vmatpush1.msra.mxu0 0.0
  %2036 = vmatprep.subr.mxu0 0.0
  %2037 = vmatpush1.msra.mxu0 0.0
  %2038 = vmatprep.subr.mxu0 0.0
  %2039 = vmatpush1.msra.mxu0 0.0
  %2040 = vmatprep.subr.mxu0 0.0
  %2041 = vmatpush1.msra.mxu0 0.0
  %2042 = vmatprep.subr.mxu0 0.0
  %2043 = vmatpush1.msra.mxu0 0.0
  %2044 = vmatprep.subr.mxu0 0.0
  %2045 = vmatpush1.msra.mxu0 0.0
  %2046 = vmatprep.subr.mxu0 0.0
  %2047 = vmatpush1.msra.mxu0 0.0
  %2048 = vmatprep.subr.mxu0 0.0
  %2049 = vmatpush1.msra.mxu0 0.0
  %2050 = vmatprep.subr.mxu0 0.0
  %2051 = vmatpush1.msra.mxu0 0.0
  %2052 = vmatprep.subr.mxu0 0.0
  %2053 = vmatpush1.msra.mxu0 0.0
  %2054 = vmatprep.subr.mxu0 0.0
  %2055 = vmatpush1.msra.mxu0 0.0
  %2056 = vmatprep.subr.mxu0 0.0
  %2057 = vmatpush1.msra.mxu0 0.0
  %2058 = vmatprep.subr.mxu0 0.0
  %2059 = vmatpush1.msra.mxu0 0.0
  %2060 = vmatprep.subr.mxu0 0.0
  %2061 = vmatpush1.msra.mxu0 0.0
  %2062 = vmatprep.subr.mxu0 0.0
  %2063 = vmatpush1.msra.mxu0 0.0
  %2064 = vmatprep.subr.mxu0 0.0
  %2065 = vmatpush1.msra.mxu0 0.0
  %2066 = vmatprep.subr.mxu0 0.0
  %2067 = vmatpush1.msra.mxu0 0.0
  %2068 = vmatprep.subr.mxu0 0.0
  %2069 = vmatpush1.msra.mxu0 0.0
  %2070 = vmatprep.subr.mxu0 0.0
  %2071 = vmatpush1.msra.mxu0 0.0
  %2072 = vmatprep.subr.mxu0 0.0
  %2073 = vmatpush1.msra.mxu0 0.0
  %2074 = vmatprep.subr.mxu0 0.0
  %2075 = vmatpush1.msra.mxu0 0.0
  %2076 = vmatprep.subr.mxu0 0.0
  %2077 = vmatpush1.msra.mxu0 0.0
  %2078 = vmatprep.subr.mxu0 0.0
  %2079 = vmatpush1.msra.mxu0 0.0
  %2080 = vmatprep.subr.mxu0 0.0
  %2081 = vmatpush1.msra.mxu0 0.0
  %2082 = vmatprep.subr.mxu0 0.0
  %2083 = vmatpush1.msra.mxu0 0.0
  %2084 = vmatprep.mubr.f32.mxu0 0.0
  %2085 = vmatmul.mubr.f32.gmra.mrb[0].mxu0 %v2015
  %v2086 = vpop.f32.mrb[0].mxu0
  %v2087 = vadd.f32 %v2012, %v2086
  %v2088 = vpop.f32.mrb[0].mxu0
  %2089 = vmatprep.mubr.f32.mxu0 0.0
  %2090 = vmatmul.mubr.f32.gmra.mrb[0].mxu0 %v2018
  %v2091 = vpop.f32.mrb[0].mxu0
  %v2092 = vadd.f32 %v2012, %v2091
  %v2093 = vpop.f32.mrb[0].mxu0
  %2094 = vdwg.mxu0
  %vm2095 = vcmask 31744
  %2096 = vst.msk [vmem:[%s14] sm:$0xff] %vm2095, %v2087
  %2097 = vst.msk [vmem:[%s14 + $0x8] sm:$0xff] %vm2095, %v2092
  // Predicated region
  $region58: #{gatv2_node_gnn.1} parent=0 // pred_check
    _
  $region59: #{gatv2_node_gnn.1} parent=0 // pred_check_branch
    %2099 = sbr.rel (0) target = $region61
  $region60: #{gatv2_node_gnn.1} parent=0 // pred_region
    _
  $region61: #{gatv2_node_gnn.1} parent=0 // pred_fallthru
    _
  // Predicated region
  $region62: #{gatv2_node_gnn.1} parent=0 // pred_check
    _
  $region63: #{gatv2_node_gnn.1} parent=0 // pred_check_branch
    %2101 = sbr.rel (0) target = $region65
  $region64: #{gatv2_node_gnn.1} parent=0 // pred_region
    _
  $region65: #{gatv2_node_gnn.1} parent=0 // pred_fallthru
    _

</llo_original>
